<compile_context>
chip_gen: v7x
topology: tpu7x:2x2x1
jax: 0.10.0
libtpu: 0.0.40
codegen_flags: <defaults>
</compile_context>

<pallas_src>
import math
import functools

import jax
import jax.numpy as jnp
import numpy as np
from jax import lax
from jax.experimental import pallas as pl
from jax.experimental.pallas import tpu as pltpu

LN_EPS = 1e-5  # torch.nn.LayerNorm default
_GELU_C = math.sqrt(2.0 / math.pi)


def _gelu_tanh(x):
    # TODO(synk): nn.GELU() default is the exact-erf form; the tanh
    # approximation (EUP tanh, no VALU-heavy erf polynomial) deviates by
    # <~1e-3 absolute, well inside the test tolerance.
    return 0.5 * x * (1.0 + jnp.tanh(_GELU_C * (x + 0.044715 * x * x * x)))


def _layernorm(v, g, b):
    mu = jnp.mean(v, axis=-1, keepdims=True)
    var = jnp.mean((v - mu) ** 2, axis=-1, keepdims=True)
    return (v - mu) * lax.rsqrt(var + LN_EPS) * g + b


def block_kernel(x_ref, ln1_g, ln1_b, w_q, b_q, w_kv, b_kv, wo, bo,
                 ln2_g, ln2_b, w1, b1, w2, b2, o_ref,
                 k_scr, v_scr, *, n_heads, tq):
    qi = pl.program_id(1)
    S, D = x_ref.shape[1], x_ref.shape[2]
    d_k = D // n_heads

    # ---- K/V for the whole sequence: computed once per batch row ----------
    @pl.when(qi == 0)
    def _():
        xs = x_ref[0]                                       # (S, D) f32
        kv = jnp.dot(xs.astype(jnp.bfloat16), w_kv[...],
                     preferred_element_type=jnp.float32) + b_kv[...]  # (S, 2D)
        # K head-split to (H, S, d_k). The per-head lane slices run once per
        # batch row, amortized over all query tiles.
        k = kv[:, :D]
        kh = jnp.stack([k[:, h * d_k:(h + 1) * d_k] for h in range(n_heads)],
                       axis=0)                              # (H, S, d_k)
        k_scr[...] = kh.astype(jnp.bfloat16)
        # V stored transposed head-major (H, d_k, S): one 2-D transpose plus a
        # tile-aligned sublane regroup — no per-head copies.
        vT = kv[:, D:].T                                    # (D, S)
        v_scr[...] = vT.reshape(n_heads, d_k, S).astype(jnp.bfloat16)

    # ---- query tile --------------------------------------------------------
    q_start = pl.multiple_of(qi * tq, tq)
    xq = x_ref[0, pl.ds(q_start, tq), :]                    # (tq, D) f32
    norm1 = _layernorm(xq, ln1_g[...], ln1_b[...])

    # 1/sqrt(d_k) already folded into w_q / b_q by the wrapper.
    q = jnp.dot(xq.astype(jnp.bfloat16), w_q[...],
                preferred_element_type=jnp.float32) + b_q[...]        # (tq, D)
    # Head-major, transposed: (H, d_k, tq) via one transpose + tile-aligned
    # sublane regroup (no per-head slice/stack on the hot path).
    qh_t = q.T.reshape(n_heads, d_k, tq).astype(jnp.bfloat16)

    # scores^T: (H, S, tq); canonical batched matmul contracting d_k.
    scores = jnp.einsum('hsd,hdq->hsq', k_scr[...], qh_t,
                        preferred_element_type=jnp.float32)
    scores = scores - jnp.max(scores, axis=1, keepdims=True)
    e = jnp.exp(scores)
    probs = e * pl.reciprocal(jnp.sum(e, axis=1, keepdims=True), approx=True)

    # attention output, transposed head-major: (H, d_k, tq)
    oh_t = jnp.einsum('hds,hsq->hdq', v_scr[...], probs.astype(jnp.bfloat16),
                      preferred_element_type=jnp.float32)
    concat = oh_t.reshape(D, tq).T                          # (tq, D) f32

    attn = jnp.dot(concat.astype(jnp.bfloat16), wo[...],
                   preferred_element_type=jnp.float32) + bo[...]
    mha_out = attn + norm1

    # ---- norm_2 + FFN ------------------------------------------------------
    norm2 = _layernorm(mha_out, ln2_g[...], ln2_b[...])
    h1 = jnp.dot(norm2.astype(jnp.bfloat16), w1[...],
                 preferred_element_type=jnp.float32) + b1[...]        # (tq, 4D)
    # GELU in bf16 (VPU/EUP bf16 on v6e/v7x); the next matmul wants bf16 anyway.
    h1 = _gelu_tanh(h1.astype(jnp.bfloat16))
    # TODO(synk): nn.Dropout is identity in eval mode; not applied here.
    ffn = jnp.dot(h1, w2[...], preferred_element_type=jnp.float32) + b2[...]

    o_ref[0] = (ffn + mha_out).astype(o_ref.dtype)


def _vmem_limit_bytes():
    # Per-generation VMEM budget: ~85% of physical, capped at 100 MiB
    # (~100 MiB on v5e/v6e's 128 MiB, ~54 MiB on v7x's 64 MiB).
    try:
        cap = pltpu.get_tpu_info().vmem_capacity_bytes
        return min(int(cap * 0.85), 100 * 1024 * 1024)
    except Exception:
        return 48 * 1024 * 1024     # safe on every generation


def block_forward(x, params, n_heads, tq=None):
    (ln1_g, ln1_b, wq, bq, wk, bk, wv, bv, wo, bo,
     ln2_g, ln2_b, w1, b1, w2, b2) = params
    B, S, D = x.shape
    d_k = D // n_heads
    H4 = 4 * D

    # Query-tile size: must divide S and be a sublane multiple (8); 256 keeps
    # the v6e/v7x MXU full on big shapes, small S just uses the whole sequence.
    if tq is None:
        tq = 256
    tq = min(tq, S)
    if S % tq != 0 or tq % 8 != 0:
        tq = S
    nq = S // tq

    # Fold the 1/sqrt(d_k) attention scale into the Q projection (free: done
    # once on the weights at trace time); fuse K/V into one (D, 2D) matmul;
    # cast matmul weights to bf16 (halves weight DMA, accumulation stays f32).
    scale = 1.0 / math.sqrt(d_k)
    w_q = (wq * scale).astype(jnp.bfloat16)
    b_q = bq * scale
    w_kv = jnp.concatenate([wk, wv], axis=1).astype(jnp.bfloat16)   # (D, 2D)
    b_kv = jnp.concatenate([bk, bv], axis=1)                        # (1, 2D)
    wo_bf = wo.astype(jnp.bfloat16)
    w1_bf = w1.astype(jnp.bfloat16)
    w2_bf = w2.astype(jnp.bfloat16)

    def const_spec(shape):
        # Grid-invariant weights/biases: never re-fetched, so single-buffer
        # them to halve their resident VMEM footprint.
        idx = lambda b, q: (0, 0)
        try:
            return pl.BlockSpec(shape, idx,
                                pipeline_mode=pl.Buffered(buffer_count=1))
        except (TypeError, ValueError):
            return pl.BlockSpec(shape, idx)

    in_specs = [
        pl.BlockSpec((1, S, D), lambda b, q: (b, 0, 0)),    # x (full seq / row)
        const_spec((1, D)), const_spec((1, D)),             # ln1 gamma, beta
        const_spec((D, D)), const_spec((1, D)),             # W_q (scaled), b_q
        const_spec((D, 2 * D)), const_spec((1, 2 * D)),     # fused W_kv, b_kv
        const_spec((D, D)), const_spec((1, D)),             # W_o, b_o
        const_spec((1, D)), const_spec((1, D)),             # ln2 gamma, beta
        const_spec((D, H4)), const_spec((1, H4)),           # L1 weight, bias
        const_spec((H4, D)), const_spec((1, D)),            # L2 weight, bias
    ]

    weight_args = (ln1_g, ln1_b, w_q, b_q, w_kv, b_kv, wo_bf, bo,
                   ln2_g, ln2_b, w1_bf, b1, w2_bf, b2)
    weight_bytes = sum(int(a.size) * a.dtype.itemsize for a in weight_args)
    cost = pl.CostEstimate(
        flops=int(B * (24 * S * D * D + 4 * S * S * D)),
        transcendentals=int(B * S * (S * n_heads + 4 * D)),
        bytes_accessed=int(weight_bytes + 2 * B * S * D * 4),
    )

    kernel = functools.partial(block_kernel, n_heads=n_heads, tq=tq)
    return pl.pallas_call(
        kernel,
        out_shape=jax.ShapeDtypeStruct((B, S, D), x.dtype),
        grid_spec=pltpu.PrefetchScalarGridSpec(
            num_scalar_prefetch=0,
            grid=(B, nq),
            in_specs=in_specs,
            out_specs=pl.BlockSpec((1, tq, D), lambda b, q: (b, q, 0)),
            scratch_shapes=[
                pltpu.VMEM((n_heads, S, d_k), jnp.bfloat16),   # K heads (H,S,dk)
                pltpu.VMEM((n_heads, d_k, S), jnp.bfloat16),   # V^T heads (H,dk,S)
            ],
        ),
        compiler_params=pltpu.CompilerParams(
            dimension_semantics=("parallel", "arbitrary"),
            vmem_limit_bytes=_vmem_limit_bytes()),
        cost_estimate=cost,
    )(x, ln1_g, ln1_b, w_q, b_q, w_kv, b_kv, wo_bf, bo,
      ln2_g, ln2_b, w1_bf, b1, w2_bf, b2)


def init_params(key, d_model, n_heads):
    del n_heads  # head count only affects the forward split, not param shapes
    H4 = 4 * d_model
    ks = jax.random.split(key, 12)

    def lin(kw, kb, fi, fo):
        w = jax.random.normal(kw, (fi, fo), jnp.float32) * 0.02
        b = jax.random.normal(kb, (1, fo), jnp.float32) * 0.02
        return w, b

    wq, bq = lin(ks[0], ks[1], d_model, d_model)
    wk, bk = lin(ks[2], ks[3], d_model, d_model)
    wv, bv = lin(ks[4], ks[5], d_model, d_model)
    wo, bo = lin(ks[6], ks[7], d_model, d_model)
    w1, b1 = lin(ks[8], ks[9], d_model, H4)
    w2, b2 = lin(ks[10], ks[11], H4, d_model)
    ln1_g = jnp.ones((1, d_model), jnp.float32)
    ln1_b = jnp.zeros((1, d_model), jnp.float32)
    ln2_g = jnp.ones((1, d_model), jnp.float32)
    ln2_b = jnp.zeros((1, d_model), jnp.float32)
    return (ln1_g, ln1_b, wq, bq, wk, bk, wv, bv, wo, bo,
            ln2_g, ln2_b, w1, b1, w2, b2)


def block_ref(x, params, n_heads):
    """Pure-JAX f32 reference mirroring the PyTorch Block forward (eval)."""
    (ln1_g, ln1_b, wq, bq, wk, bk, wv, bv, wo, bo,
     ln2_g, ln2_b, w1, b1, w2, b2) = params
    B, S, D = x.shape
    d_k = D // n_heads

    def ln(v, g, b):
        mu = v.mean(-1, keepdims=True)
        var = ((v - mu) ** 2).mean(-1, keepdims=True)
        return (v - mu) / jnp.sqrt(var + LN_EPS) * g + b

    norm1 = ln(x, ln1_g[0], ln1_b[0])
    q = x @ wq + bq[0]
    k = x @ wk + bk[0]
    v = x @ wv + bv[0]

    def heads(t):
        return t.reshape(B, S, n_heads, d_k).transpose(0, 2, 1, 3)

    qh, kh, vh = heads(q), heads(k), heads(v)
    sc = qh @ kh.transpose(0, 1, 3, 2) / math.sqrt(d_k)
    w = jax.nn.softmax(sc, axis=-1)
    av = (w @ vh).transpose(0, 2, 1, 3).reshape(B, S, D)
    attn = av @ wo + bo[0]
    mha_out = attn + norm1
    norm2 = ln(mha_out, ln2_g[0], ln2_b[0])
    ff = jax.nn.gelu(norm2 @ w1 + b1[0], approximate=False) @ w2 + b2[0]
    return ff + mha_out


if __name__ == "__main__":
    # Small shapes; S=16 with tq=8 exercises the (batch, query-tile) grid and
    # the K/V-scratch reuse across tiles.
    B, S, D, N_HEADS = 2, 16, 32, 4
    key = jax.random.PRNGKey(0)
    kx, kp = jax.random.split(key)
    x = jax.random.normal(kx, (B, S, D), jnp.float32)
    params = init_params(kp, D, N_HEADS)

    out = block_forward(x, params, N_HEADS, tq=8)
    out = jax.block_until_ready(out)

    ref = block_ref(x, params, N_HEADS)
    assert out.shape == (B, S, D)
    np.testing.assert_allclose(np.asarray(out), np.asarray(ref),
                               rtol=2e-2, atol=2e-2)
    print("KERNEL_OK")
</pallas_src>

<mosaic_0001>
module attributes {stable_mosaic.version = 11 : i64} {
  func.func @block_kernel(%arg0: i32, %arg1: i32, %arg2: memref<1x16x32xf32, #tpu.memory_space<vmem>>, %arg3: memref<1x32xf32, #tpu.memory_space<vmem>>, %arg4: memref<1x32xf32, #tpu.memory_space<vmem>>, %arg5: memref<32x32xbf16, #tpu.memory_space<vmem>>, %arg6: memref<1x32xf32, #tpu.memory_space<vmem>>, %arg7: memref<32x64xbf16, #tpu.memory_space<vmem>>, %arg8: memref<1x64xf32, #tpu.memory_space<vmem>>, %arg9: memref<32x32xbf16, #tpu.memory_space<vmem>>, %arg10: memref<1x32xf32, #tpu.memory_space<vmem>>, %arg11: memref<1x32xf32, #tpu.memory_space<vmem>>, %arg12: memref<1x32xf32, #tpu.memory_space<vmem>>, %arg13: memref<32x128xbf16, #tpu.memory_space<vmem>>, %arg14: memref<1x128xf32, #tpu.memory_space<vmem>>, %arg15: memref<128x32xbf16, #tpu.memory_space<vmem>>, %arg16: memref<1x32xf32, #tpu.memory_space<vmem>>, %arg17: memref<1x8x32xf32, #tpu.memory_space<vmem>>, %arg18: memref<4x16x8xbf16, #tpu.memory_space<vmem>>, %arg19: memref<4x8x16xbf16, #tpu.memory_space<vmem>>) attributes {dimension_semantics = [#tpu.dimension_semantics<parallel>, #tpu.dimension_semantics<arbitrary>], iteration_bounds = array<i64: 2, 2>, scalar_prefetch = 0 : i64, scratch_operands = 2 : i64, tpu.core_type = #tpu.core_type<tc>, window_params = [{transform_indices = @transform_0, window_bounds = array<i64: 1, 16, 32>}, {pipeline_mode = #tpu.pipeline_mode<synchronous>, transform_indices = @transform_1, window_bounds = array<i64: 1, 32>}, {pipeline_mode = #tpu.pipeline_mode<synchronous>, transform_indices = @transform_2, window_bounds = array<i64: 1, 32>}, {pipeline_mode = #tpu.pipeline_mode<synchronous>, transform_indices = @transform_3, window_bounds = array<i64: 32, 32>}, {pipeline_mode = #tpu.pipeline_mode<synchronous>, transform_indices = @transform_4, window_bounds = array<i64: 1, 32>}, {pipeline_mode = #tpu.pipeline_mode<synchronous>, transform_indices = @transform_5, window_bounds = array<i64: 32, 64>}, {pipeline_mode = #tpu.pipeline_mode<synchronous>, transform_indices = @transform_6, window_bounds = array<i64: 1, 64>}, {pipeline_mode = #tpu.pipeline_mode<synchronous>, transform_indices = @transform_7, window_bounds = array<i64: 32, 32>}, {pipeline_mode = #tpu.pipeline_mode<synchronous>, transform_indices = @transform_8, window_bounds = array<i64: 1, 32>}, {pipeline_mode = #tpu.pipeline_mode<synchronous>, transform_indices = @transform_9, window_bounds = array<i64: 1, 32>}, {pipeline_mode = #tpu.pipeline_mode<synchronous>, transform_indices = @transform_10, window_bounds = array<i64: 1, 32>}, {pipeline_mode = #tpu.pipeline_mode<synchronous>, transform_indices = @transform_11, window_bounds = array<i64: 32, 128>}, {pipeline_mode = #tpu.pipeline_mode<synchronous>, transform_indices = @transform_12, window_bounds = array<i64: 1, 128>}, {pipeline_mode = #tpu.pipeline_mode<synchronous>, transform_indices = @transform_13, window_bounds = array<i64: 128, 32>}, {pipeline_mode = #tpu.pipeline_mode<synchronous>, transform_indices = @transform_14, window_bounds = array<i64: 1, 32>}, {transform_indices = @transform_15, window_bounds = array<i64: 1, 8, 32>}]} {
    %c0_i32 = arith.constant 0 : i32
    %0 = arith.cmpi eq, %arg1, %c0_i32 : i32
    %1 = arith.extui %0 : i1 to i32
    %c0_i32_0 = arith.constant 0 : i32
    %2 = arith.cmpi ne, %1, %c0_i32_0 : i32
    scf.if %2 {
      %c0_56 = arith.constant 0 : index
      %c0_57 = arith.constant 0 : index
      %c0_58 = arith.constant 0 : index
      %118 = vector.load %arg2[%c0_56, %c0_57, %c0_58] : memref<1x16x32xf32, #tpu.memory_space<vmem>>, vector<1x16x32xf32>
      %119 = vector.shape_cast %118 : vector<1x16x32xf32> to vector<16x32xf32>
      %120 = arith.truncf %119 : vector<16x32xf32> to vector<16x32xbf16>
      %c0_59 = arith.constant 0 : index
      %c0_60 = arith.constant 0 : index
      %121 = vector.load %arg7[%c0_59, %c0_60] : memref<32x64xbf16, #tpu.memory_space<vmem>>, vector<32x64xbf16>
      %cst_61 = arith.constant dense<0.000000e+00> : vector<16x64xf32>
      %122 = tpu.matmul %120, %121, %cst_61 {dimension_numbers = #tpu.dot_dimension_numbers<[1], [0], [0], [1], [0, 0, 1, 1], [], []>} : vector<16x32xbf16>, vector<32x64xbf16>, vector<16x64xf32> -> vector<16x64xf32>
      %c0_62 = arith.constant 0 : index
      %c0_63 = arith.constant 0 : index
      %123 = vector.load %arg8[%c0_62, %c0_63] : memref<1x64xf32, #tpu.memory_space<vmem>>, vector<1x64xf32>
      %124 = vector.broadcast %123 : vector<1x64xf32> to vector<16x64xf32>
      %125 = arith.addf %122, %124 : vector<16x64xf32>
      %126 = vector.extract_strided_slice %125 {offsets = [0, 0], sizes = [16, 32], strides = [1, 1]} : vector<16x64xf32> to vector<16x32xf32>
      %127 = vector.extract_strided_slice %126 {offsets = [0, 0], sizes = [16, 8], strides = [1, 1]} : vector<16x32xf32> to vector<16x8xf32>
      %128 = vector.extract_strided_slice %126 {offsets = [0, 8], sizes = [16, 8], strides = [1, 1]} : vector<16x32xf32> to vector<16x8xf32>
      %129 = vector.extract_strided_slice %126 {offsets = [0, 16], sizes = [16, 8], strides = [1, 1]} : vector<16x32xf32> to vector<16x8xf32>
      %130 = vector.extract_strided_slice %126 {offsets = [0, 24], sizes = [16, 8], strides = [1, 1]} : vector<16x32xf32> to vector<16x8xf32>
      %131 = vector.shape_cast %127 : vector<16x8xf32> to vector<1x16x8xf32>
      %132 = vector.shape_cast %128 : vector<16x8xf32> to vector<1x16x8xf32>
      %133 = vector.shape_cast %129 : vector<16x8xf32> to vector<1x16x8xf32>
      %134 = vector.shape_cast %130 : vector<16x8xf32> to vector<1x16x8xf32>
      %135 = tpu.concatenate %131, %132, %133, %134 in 0 : vector<1x16x8xf32>, vector<1x16x8xf32>, vector<1x16x8xf32>, vector<1x16x8xf32> -> vector<4x16x8xf32>
      %136 = arith.truncf %135 : vector<4x16x8xf32> to vector<4x16x8xbf16>
      %c0_64 = arith.constant 0 : index
      %c0_65 = arith.constant 0 : index
      %c0_66 = arith.constant 0 : index
      %137 = vector.load %arg18[%c0_64, %c0_65, %c0_66] : memref<4x16x8xbf16, #tpu.memory_space<vmem>>, vector<4x16x8xbf16>
      tpu.vector_store %arg18[%c0_64, %c0_65, %c0_66], %136 {strides = array<i32>} : memref<4x16x8xbf16, #tpu.memory_space<vmem>>, vector<4x16x8xbf16>,
      %138 = vector.extract_strided_slice %125 {offsets = [0, 32], sizes = [16, 32], strides = [1, 1]} : vector<16x64xf32> to vector<16x32xf32>
      %139 = tpu.transpose %138, [1, 0] : vector<16x32xf32> -> vector<32x16xf32>
      %140 = vector.shape_cast %139 : vector<32x16xf32> to vector<4x8x16xf32>
      %141 = arith.truncf %140 : vector<4x8x16xf32> to vector<4x8x16xbf16>
      %c0_67 = arith.constant 0 : index
      %c0_68 = arith.constant 0 : index
      %c0_69 = arith.constant 0 : index
      %142 = vector.load %arg19[%c0_67, %c0_68, %c0_69] : memref<4x8x16xbf16, #tpu.memory_space<vmem>>, vector<4x8x16xbf16>
      tpu.vector_store %arg19[%c0_67, %c0_68, %c0_69], %141 {strides = array<i32>} : memref<4x8x16xbf16, #tpu.memory_space<vmem>>, vector<4x8x16xbf16>,
    } else {
    }
    %c8_i32 = arith.constant 8 : i32
    %3 = arith.muli %arg1, %c8_i32 : i32
    %4 = tpu.assume_multiple %3, 8 : i32
    %c0 = arith.constant 0 : index
    %5 = arith.index_cast %4 : i32 to index
    %c0_1 = arith.constant 0 : index
    %6 = vector.load %arg2[%c0, %5, %c0_1] : memref<1x16x32xf32, #tpu.memory_space<vmem>>, vector<1x8x32xf32>
    %7 = vector.shape_cast %6 : vector<1x8x32xf32> to vector<8x32xf32>
    %c0_2 = arith.constant 0 : index
    %c0_3 = arith.constant 0 : index
    %8 = vector.load %arg3[%c0_2, %c0_3] : memref<1x32xf32, #tpu.memory_space<vmem>>, vector<1x32xf32>
    %c0_4 = arith.constant 0 : index
    %c0_5 = arith.constant 0 : index
    %9 = vector.load %arg4[%c0_4, %c0_5] : memref<1x32xf32, #tpu.memory_space<vmem>>, vector<1x32xf32>
    %cst = arith.constant dense<0.000000e+00> : vector<8xf32>
    %10 = vector.multi_reduction <add>, %7, %cst [1] : vector<8x32xf32> to vector<8xf32>
    %11 = vector.shape_cast %10 : vector<8xf32> to vector<8x1xf32>
    %cst_6 = arith.constant 3.200000e+01 : f32
    %12 = vector.broadcast %cst_6 : f32 to vector<8x1xf32>
    %13 = arith.divf %11, %12 : vector<8x1xf32>
    %14 = vector.broadcast %13 : vector<8x1xf32> to vector<8x32xf32>
    %15 = arith.subf %7, %14 : vector<8x32xf32>
    %16 = arith.mulf %15, %15 : vector<8x32xf32>
    %cst_7 = arith.constant dense<0.000000e+00> : vector<8xf32>
    %17 = vector.multi_reduction <add>, %16, %cst_7 [1] : vector<8x32xf32> to vector<8xf32>
    %18 = vector.shape_cast %17 : vector<8xf32> to vector<8x1xf32>
    %cst_8 = arith.constant 3.200000e+01 : f32
    %19 = vector.broadcast %cst_8 : f32 to vector<8x1xf32>
    %20 = arith.divf %18, %19 : vector<8x1xf32>
    %21 = vector.broadcast %13 : vector<8x1xf32> to vector<8x32xf32>
    %22 = arith.subf %7, %21 : vector<8x32xf32>
    %cst_9 = arith.constant 9.99999974E-6 : f32
    %23 = vector.broadcast %cst_9 : f32 to vector<8x1xf32>
    %24 = arith.addf %20, %23 : vector<8x1xf32>
    %25 = math.rsqrt %24 : vector<8x1xf32>
    %26 = vector.broadcast %25 : vector<8x1xf32> to vector<8x32xf32>
    %27 = arith.mulf %22, %26 : vector<8x32xf32>
    %28 = vector.broadcast %8 : vector<1x32xf32> to vector<8x32xf32>
    %29 = arith.mulf %27, %28 : vector<8x32xf32>
    %30 = vector.broadcast %9 : vector<1x32xf32> to vector<8x32xf32>
    %31 = arith.addf %29, %30 : vector<8x32xf32>
    %32 = arith.truncf %7 : vector<8x32xf32> to vector<8x32xbf16>
    %c0_10 = arith.constant 0 : index
    %c0_11 = arith.constant 0 : index
    %33 = vector.load %arg5[%c0_10, %c0_11] : memref<32x32xbf16, #tpu.memory_space<vmem>>, vector<32x32xbf16>
    %cst_12 = arith.constant dense<0.000000e+00> : vector<8x32xf32>
    %34 = tpu.matmul %32, %33, %cst_12 {dimension_numbers = #tpu.dot_dimension_numbers<[1], [0], [0], [1], [0, 0, 1, 1], [], []>} : vector<8x32xbf16>, vector<32x32xbf16>, vector<8x32xf32> -> vector<8x32xf32>
    %c0_13 = arith.constant 0 : index
    %c0_14 = arith.constant 0 : index
    %35 = vector.load %arg6[%c0_13, %c0_14] : memref<1x32xf32, #tpu.memory_space<vmem>>, vector<1x32xf32>
    %36 = vector.broadcast %35 : vector<1x32xf32> to vector<8x32xf32>
    %37 = arith.addf %34, %36 : vector<8x32xf32>
    %38 = tpu.transpose %37, [1, 0] : vector<8x32xf32> -> vector<32x8xf32>
    %39 = vector.shape_cast %38 : vector<32x8xf32> to vector<4x8x8xf32>
    %40 = arith.truncf %39 : vector<4x8x8xf32> to vector<4x8x8xbf16>
    %c0_15 = arith.constant 0 : index
    %c0_16 = arith.constant 0 : index
    %c0_17 = arith.constant 0 : index
    %41 = vector.load %arg18[%c0_15, %c0_16, %c0_17] : memref<4x16x8xbf16, #tpu.memory_space<vmem>>, vector<4x16x8xbf16>
    "tpu.trace_start"() <{level = 10 : i32, message = "hsd,hdq->hsq"}> : () -> ()
    %cst_18 = arith.constant dense<0.000000e+00> : vector<4x16x8xf32>
    %42 = tpu.matmul %41, %40, %cst_18 {dimension_numbers = #tpu.dot_dimension_numbers<[2], [1], [1], [2], [0, 0, 0, 1, 1, 2], [0], [0]>} : vector<4x16x8xbf16>, vector<4x8x8xbf16>, vector<4x16x8xf32> -> vector<4x16x8xf32>
    "tpu.trace_stop"() : () -> ()
    %cst_19 = arith.constant dense<0xFF800000> : vector<4x8xf32>
    %43 = vector.multi_reduction <maximumf>, %42, %cst_19 [1] : vector<4x16x8xf32> to vector<4x8xf32>
    %44 = vector.shape_cast %43 : vector<4x8xf32> to vector<4x1x8xf32>
    %45 = vector.broadcast %44 : vector<4x1x8xf32> to vector<4x16x8xf32>
    %46 = arith.subf %42, %45 : vector<4x16x8xf32>
    %47 = math.exp %46 : vector<4x16x8xf32>
    %cst_20 = arith.constant dense<0.000000e+00> : vector<4x8xf32>
    %48 = vector.multi_reduction <add>, %47, %cst_20 [1] : vector<4x16x8xf32> to vector<4x8xf32>
    %49 = vector.shape_cast %48 : vector<4x8xf32> to vector<4x1x8xf32>
    %50 = tpu.reciprocal %49 {approx = true} : vector<4x1x8xf32> -> vector<4x1x8xf32>
    %51 = vector.broadcast %50 : vector<4x1x8xf32> to vector<4x16x8xf32>
    %52 = arith.mulf %47, %51 : vector<4x16x8xf32>
    %c0_21 = arith.constant 0 : index
    %c0_22 = arith.constant 0 : index
    %c0_23 = arith.constant 0 : index
    %53 = vector.load %arg19[%c0_21, %c0_22, %c0_23] : memref<4x8x16xbf16, #tpu.memory_space<vmem>>, vector<4x8x16xbf16>
    %54 = arith.truncf %52 : vector<4x16x8xf32> to vector<4x16x8xbf16>
    "tpu.trace_start"() <{level = 10 : i32, message = "hds,hsq->hdq"}> : () -> ()
    %cst_24 = arith.constant dense<0.000000e+00> : vector<4x8x8xf32>
    %55 = tpu.matmul %53, %54, %cst_24 {dimension_numbers = #tpu.dot_dimension_numbers<[2], [1], [1], [2], [0, 0, 0, 1, 1, 2], [0], [0]>} : vector<4x8x16xbf16>, vector<4x16x8xbf16>, vector<4x8x8xf32> -> vector<4x8x8xf32>
    "tpu.trace_stop"() : () -> ()
    %56 = vector.shape_cast %55 : vector<4x8x8xf32> to vector<32x8xf32>
    %57 = tpu.transpose %56, [1, 0] : vector<32x8xf32> -> vector<8x32xf32>
    %58 = arith.truncf %57 : vector<8x32xf32> to vector<8x32xbf16>
    %c0_25 = arith.constant 0 : index
    %c0_26 = arith.constant 0 : index
    %59 = vector.load %arg9[%c0_25, %c0_26] : memref<32x32xbf16, #tpu.memory_space<vmem>>, vector<32x32xbf16>
    %cst_27 = arith.constant dense<0.000000e+00> : vector<8x32xf32>
    %60 = tpu.matmul %58, %59, %cst_27 {dimension_numbers = #tpu.dot_dimension_numbers<[1], [0], [0], [1], [0, 0, 1, 1], [], []>} : vector<8x32xbf16>, vector<32x32xbf16>, vector<8x32xf32> -> vector<8x32xf32>
    %c0_28 = arith.constant 0 : index
    %c0_29 = arith.constant 0 : index
    %61 = vector.load %arg10[%c0_28, %c0_29] : memref<1x32xf32, #tpu.memory_space<vmem>>, vector<1x32xf32>
    %62 = vector.broadcast %61 : vector<1x32xf32> to vector<8x32xf32>
    %63 = arith.addf %60, %62 : vector<8x32xf32>
    %64 = arith.addf %63, %31 : vector<8x32xf32>
    %c0_30 = arith.constant 0 : index
    %c0_31 = arith.constant 0 : index
    %65 = vector.load %arg11[%c0_30, %c0_31] : memref<1x32xf32, #tpu.memory_space<vmem>>, vector<1x32xf32>
    %c0_32 = arith.constant 0 : index
    %c0_33 = arith.constant 0 : index
    %66 = vector.load %arg12[%c0_32, %c0_33] : memref<1x32xf32, #tpu.memory_space<vmem>>, vector<1x32xf32>
    %cst_34 = arith.constant dense<0.000000e+00> : vector<8xf32>
    %67 = vector.multi_reduction <add>, %64, %cst_34 [1] : vector<8x32xf32> to vector<8xf32>
    %68 = vector.shape_cast %67 : vector<8xf32> to vector<8x1xf32>
    %cst_35 = arith.constant 3.200000e+01 : f32
    %69 = vector.broadcast %cst_35 : f32 to vector<8x1xf32>
    %70 = arith.divf %68, %69 : vector<8x1xf32>
    %71 = vector.broadcast %70 : vector<8x1xf32> to vector<8x32xf32>
    %72 = arith.subf %64, %71 : vector<8x32xf32>
    %73 = arith.mulf %72, %72 : vector<8x32xf32>
    %cst_36 = arith.constant dense<0.000000e+00> : vector<8xf32>
    %74 = vector.multi_reduction <add>, %73, %cst_36 [1] : vector<8x32xf32> to vector<8xf32>
    %75 = vector.shape_cast %74 : vector<8xf32> to vector<8x1xf32>
    %cst_37 = arith.constant 3.200000e+01 : f32
    %76 = vector.broadcast %cst_37 : f32 to vector<8x1xf32>
    %77 = arith.divf %75, %76 : vector<8x1xf32>
    %78 = vector.broadcast %70 : vector<8x1xf32> to vector<8x32xf32>
    %79 = arith.subf %64, %78 : vector<8x32xf32>
    %cst_38 = arith.constant 9.99999974E-6 : f32
    %80 = vector.broadcast %cst_38 : f32 to vector<8x1xf32>
    %81 = arith.addf %77, %80 : vector<8x1xf32>
    %82 = math.rsqrt %81 : vector<8x1xf32>
    %83 = vector.broadcast %82 : vector<8x1xf32> to vector<8x32xf32>
    %84 = arith.mulf %79, %83 : vector<8x32xf32>
    %85 = vector.broadcast %65 : vector<1x32xf32> to vector<8x32xf32>
    %86 = arith.mulf %84, %85 : vector<8x32xf32>
    %87 = vector.broadcast %66 : vector<1x32xf32> to vector<8x32xf32>
    %88 = arith.addf %86, %87 : vector<8x32xf32>
    %89 = arith.truncf %88 : vector<8x32xf32> to vector<8x32xbf16>
    %c0_39 = arith.constant 0 : index
    %c0_40 = arith.constant 0 : index
    %90 = vector.load %arg13[%c0_39, %c0_40] : memref<32x128xbf16, #tpu.memory_space<vmem>>, vector<32x128xbf16>
    %cst_41 = arith.constant dense<0.000000e+00> : vector<8x128xf32>
    %91 = tpu.matmul %89, %90, %cst_41 {dimension_numbers = #tpu.dot_dimension_numbers<[1], [0], [0], [1], [0, 0, 1, 1], [], []>} : vector<8x32xbf16>, vector<32x128xbf16>, vector<8x128xf32> -> vector<8x128xf32>
    %c0_42 = arith.constant 0 : index
    %c0_43 = arith.constant 0 : index
    %92 = vector.load %arg14[%c0_42, %c0_43] : memref<1x128xf32, #tpu.memory_space<vmem>>, vector<1x128xf32>
    %93 = vector.broadcast %92 : vector<1x128xf32> to vector<8x128xf32>
    %94 = arith.addf %91, %93 : vector<8x128xf32>
    %95 = arith.truncf %94 : vector<8x128xf32> to vector<8x128xbf16>
    %cst_44 = arith.constant 5.000000e-01 : bf16
    %96 = vector.broadcast %cst_44 : bf16 to vector<8x128xbf16>
    %97 = arith.mulf %96, %95 : vector<8x128xbf16>
    %cst_45 = arith.constant 4.467770e-02 : bf16
    %98 = vector.broadcast %cst_45 : bf16 to vector<8x128xbf16>
    %99 = arith.mulf %98, %95 : vector<8x128xbf16>
    %100 = arith.mulf %99, %95 : vector<8x128xbf16>
    %101 = arith.mulf %100, %95 : vector<8x128xbf16>
    %102 = arith.addf %95, %101 : vector<8x128xbf16>
    %cst_46 = arith.constant 7.968750e-01 : bf16
    %103 = vector.broadcast %cst_46 : bf16 to vector<8x128xbf16>
    %104 = arith.mulf %103, %102 : vector<8x128xbf16>
    %105 = math.tanh %104 : vector<8x128xbf16>
    %cst_47 = arith.constant 1.000000e+00 : bf16
    %106 = vector.broadcast %cst_47 : bf16 to vector<8x128xbf16>
    %107 = arith.addf %106, %105 : vector<8x128xbf16>
    %108 = arith.mulf %97, %107 : vector<8x128xbf16>
    %c0_48 = arith.constant 0 : index
    %c0_49 = arith.constant 0 : index
    %109 = vector.load %arg15[%c0_48, %c0_49] : memref<128x32xbf16, #tpu.memory_space<vmem>>, vector<128x32xbf16>
    %cst_50 = arith.constant dense<0.000000e+00> : vector<8x32xf32>
    %110 = tpu.matmul %108, %109, %cst_50 {dimension_numbers = #tpu.dot_dimension_numbers<[1], [0], [0], [1], [0, 0, 1, 1], [], []>} : vector<8x128xbf16>, vector<128x32xbf16>, vector<8x32xf32> -> vector<8x32xf32>
    %c0_51 = arith.constant 0 : index
    %c0_52 = arith.constant 0 : index
    %111 = vector.load %arg16[%c0_51, %c0_52] : memref<1x32xf32, #tpu.memory_space<vmem>>, vector<1x32xf32>
    %112 = vector.broadcast %111 : vector<1x32xf32> to vector<8x32xf32>
    %113 = arith.addf %110, %112 : vector<8x32xf32>
    %114 = arith.addf %113, %64 : vector<8x32xf32>
    %c0_53 = arith.constant 0 : index
    %c0_54 = arith.constant 0 : index
    %c0_55 = arith.constant 0 : index
    %115 = vector.load %arg17[%c0_53, %c0_54, %c0_55] : memref<1x8x32xf32, #tpu.memory_space<vmem>>, vector<1x8x32xf32>
    %116 = vector.shape_cast %115 : vector<1x8x32xf32> to vector<8x32xf32>
    %117 = vector.shape_cast %114 : vector<8x32xf32> to vector<1x8x32xf32>
    tpu.vector_store %arg17[%c0_53, %c0_54, %c0_55], %117 {strides = array<i32>} : memref<1x8x32xf32, #tpu.memory_space<vmem>>, vector<1x8x32xf32>,
    return
  }
  func.func @transform_0(%arg0: i32, %arg1: i32) -> (i32, i32, i32) {
    %c0_i32 = arith.constant 0 : i32
    %c0_i32_0 = arith.constant 0 : i32
    %c0_i32_1 = arith.constant 0 : i32
    return %arg0, %c0_i32, %c0_i32_0 : i32, i32, i32
  }
  func.func @transform_1(%arg0: i32, %arg1: i32) -> (i32, i32) {
    %c0_i32 = arith.constant 0 : i32
    %c0_i32_0 = arith.constant 0 : i32
    %c0_i32_1 = arith.constant 0 : i32
    return %c0_i32, %c0_i32_0 : i32, i32
  }
  func.func @transform_2(%arg0: i32, %arg1: i32) -> (i32, i32) {
    %c0_i32 = arith.constant 0 : i32
    %c0_i32_0 = arith.constant 0 : i32
    %c0_i32_1 = arith.constant 0 : i32
    return %c0_i32, %c0_i32_0 : i32, i32
  }
  func.func @transform_3(%arg0: i32, %arg1: i32) -> (i32, i32) {
    %c0_i32 = arith.constant 0 : i32
    %c0_i32_0 = arith.constant 0 : i32
    %c0_i32_1 = arith.constant 0 : i32
    return %c0_i32, %c0_i32_0 : i32, i32
  }
  func.func @transform_4(%arg0: i32, %arg1: i32) -> (i32, i32) {
    %c0_i32 = arith.constant 0 : i32
    %c0_i32_0 = arith.constant 0 : i32
    %c0_i32_1 = arith.constant 0 : i32
    return %c0_i32, %c0_i32_0 : i32, i32
  }
  func.func @transform_5(%arg0: i32, %arg1: i32) -> (i32, i32) {
    %c0_i32 = arith.constant 0 : i32
    %c0_i32_0 = arith.constant 0 : i32
    %c0_i32_1 = arith.constant 0 : i32
    return %c0_i32, %c0_i32_0 : i32, i32
  }
  func.func @transform_6(%arg0: i32, %arg1: i32) -> (i32, i32) {
    %c0_i32 = arith.constant 0 : i32
    %c0_i32_0 = arith.constant 0 : i32
    %c0_i32_1 = arith.constant 0 : i32
    return %c0_i32, %c0_i32_0 : i32, i32
  }
  func.func @transform_7(%arg0: i32, %arg1: i32) -> (i32, i32) {
    %c0_i32 = arith.constant 0 : i32
    %c0_i32_0 = arith.constant 0 : i32
    %c0_i32_1 = arith.constant 0 : i32
    return %c0_i32, %c0_i32_0 : i32, i32
  }
  func.func @transform_8(%arg0: i32, %arg1: i32) -> (i32, i32) {
    %c0_i32 = arith.constant 0 : i32
    %c0_i32_0 = arith.constant 0 : i32
    %c0_i32_1 = arith.constant 0 : i32
    return %c0_i32, %c0_i32_0 : i32, i32
  }
  func.func @transform_9(%arg0: i32, %arg1: i32) -> (i32, i32) {
    %c0_i32 = arith.constant 0 : i32
    %c0_i32_0 = arith.constant 0 : i32
    %c0_i32_1 = arith.constant 0 : i32
    return %c0_i32, %c0_i32_0 : i32, i32
  }
  func.func @transform_10(%arg0: i32, %arg1: i32) -> (i32, i32) {
    %c0_i32 = arith.constant 0 : i32
    %c0_i32_0 = arith.constant 0 : i32
    %c0_i32_1 = arith.constant 0 : i32
    return %c0_i32, %c0_i32_0 : i32, i32
  }
  func.func @transform_11(%arg0: i32, %arg1: i32) -> (i32, i32) {
    %c0_i32 = arith.constant 0 : i32
    %c0_i32_0 = arith.constant 0 : i32
    %c0_i32_1 = arith.constant 0 : i32
    return %c0_i32, %c0_i32_0 : i32, i32
  }
  func.func @transform_12(%arg0: i32, %arg1: i32) -> (i32, i32) {
    %c0_i32 = arith.constant 0 : i32
    %c0_i32_0 = arith.constant 0 : i32
    %c0_i32_1 = arith.constant 0 : i32
    return %c0_i32, %c0_i32_0 : i32, i32
  }
  func.func @transform_13(%arg0: i32, %arg1: i32) -> (i32, i32) {
    %c0_i32 = arith.constant 0 : i32
    %c0_i32_0 = arith.constant 0 : i32
    %c0_i32_1 = arith.constant 0 : i32
    return %c0_i32, %c0_i32_0 : i32, i32
  }
  func.func @transform_14(%arg0: i32, %arg1: i32) -> (i32, i32) {
    %c0_i32 = arith.constant 0 : i32
    %c0_i32_0 = arith.constant 0 : i32
    %c0_i32_1 = arith.constant 0 : i32
    return %c0_i32, %c0_i32_0 : i32, i32
  }
  func.func @transform_15(%arg0: i32, %arg1: i32) -> (i32, i32, i32) {
    %c0_i32 = arith.constant 0 : i32
    %c0_i32_0 = arith.constant 0 : i32
    return %arg0, %arg1, %c0_i32 : i32, i32, i32
  }
}

</mosaic_0001>

<llo_original>
// kernel: tpu_custom_call.1
$region0: #{tpu_custom_call.1}
  #allocation0 [shape = 'u32[]', space=smem, size = 0x4, offset = 0x4, fixed_abs, tag = 'smem constant byte address 0x4 - core index']
  #allocation1 [shape = 'u32[144,128]{1,0:T(1,128)}', space=vmem, size = 0x12000, scoped, tag = 'internal scratch']
  #allocation2 [shape = 'bf16[4,16,8]{2,1,0:T(16,128)(2,1)}', space=vmem, size = 0x4000, scoped, tag = 'scratch operand']
  #allocation3 [shape = 'bf16[4,8,16]{2,1,0:T(8,128)(2,1)}', space=vmem, size = 0x2000, scoped, tag = 'scratch operand']
  %s0 = inlined_call_operand.vmem [shape: f32[2,16,32], index: 0, kind: input, shape index: {}]
  %s1 = inlined_call_operand.vmem [shape: f32[1,32], index: 1, kind: input, shape index: {}]
  %s2 = inlined_call_operand.vmem [shape: f32[1,32], index: 2, kind: input, shape index: {}]
  %s3 = inlined_call_operand.vmem [shape: bf16[32,32], index: 3, kind: input, shape index: {}]
  %s4 = inlined_call_operand.hbm [shape: f32[1,32], index: 4, kind: input, shape index: {}]
  %s5 = inlined_call_operand.vmem [shape: bf16[32,64], index: 5, kind: input, shape index: {}]
  %s6 = inlined_call_operand.hbm [shape: f32[1,64], index: 6, kind: input, shape index: {}]
  %s7 = inlined_call_operand.vmem [shape: bf16[32,32], index: 7, kind: input, shape index: {}]
  %s8 = inlined_call_operand.hbm [shape: f32[1,32], index: 8, kind: input, shape index: {}]
  %s9 = inlined_call_operand.hbm [shape: f32[1,32], index: 9, kind: input, shape index: {}]
  %s10 = inlined_call_operand.vmem [shape: f32[1,32], index: 10, kind: input, shape index: {}]
  %s11 = inlined_call_operand.vmem [shape: bf16[32,128], index: 11, kind: input, shape index: {}]
  %s12 = inlined_call_operand.vmem [shape: f32[1,128], index: 12, kind: input, shape index: {}]
  %s13 = inlined_call_operand.vmem [shape: bf16[128,32], index: 13, kind: input, shape index: {}]
  %s14 = inlined_call_operand.vmem [shape: f32[1,32], index: 14, kind: input, shape index: {}]
  %s15 = inlined_call_operand.hbm [shape: f32[2,16,32], index: 15, kind: output, shape index: {}]
  %s16 = sld [smem:[#allocation0]]
  $region113: #{tpu_custom_call.1} parent=0
    _
  %s18 = ssub.s32 1, %s16
  %s19 = scalar_select 0, %s18, %s16
  $region1: #{tpu_custom_call.1} parent=0
    #allocation4 [shape = 'u8[512]{0}', space=vmem, size = 0x400, scoped, tag = 'input window, operand 4, single buffered']
    #allocation5 [shape = 's32[2]{0}', space=sflag, size = 0x8, scoped, tag = 'scoped memory for tpu_custom_call.1']
    #allocation6 [shape = 's32[2]{0}', space=sflag, size = 0x8, scoped, tag = 'scoped memory for tpu_custom_call.1']
    #allocation7 [shape = 'u8[512]{0}', space=vmem, size = 0x400, scoped, tag = 'input window, operand 6, single buffered']
    #allocation8 [shape = 's32[1]{0}', space=sflag, size = 0x4, scoped, tag = 'scoped memory for tpu_custom_call.1']
    #allocation9 [shape = 'u8[512]{0}', space=vmem, size = 0x400, scoped, tag = 'input window, operand 8, single buffered']
    #allocation10 [shape = 'u8[512]{0}', space=vmem, size = 0x400, scoped, tag = 'input window, operand 9, single buffered']
    #allocation11 [shape = 's32[1]{0}', space=sflag, size = 0x4, scoped, tag = 'scoped memory for tpu_custom_call.1']
    #allocation12 [shape = 'u8[8192]{0}', space=vmem, size = 0x2000, scoped, tag = 'output window, operand 0']
    %20 = vsyncpa [#allocation5], 0
    %21 = vsyncpa [#allocation8], 0
    %22 = vsyncpa [#allocation11], 0
    %23 = vsyncpa [#allocation6], 0
    %s24 = scalar_lea.sflag [#allocation6], 1
    %25 = vsyncpa %s24, 0
    loop: start=0, step=1, limit=6
    $region2: #{tpu_custom_call.1} parent=1 // loop_pre_header
      _
    $region3: #{tpu_custom_call.1} parent=1 // loop_header
      %s27 = sphi 0, %s31
      %p28 = scmp.ge.s32.totalorder %s27, 6
      %s34 = sphi 0, %s46
      %s35 = sphi 0, %s42
      %s36 = sphi 0, %s34
      %s37 = sphi 0, %s35
      %s38 = sphi 0, %s36
      %s39 = sphi 0, %s37
      %s49 = sphi 0, %s51
      %s52 = sphi 0, %s49
      %s53 = sphi 0, %s52
      %s69 = sphi 0, %s53
      %s73 = sphi 0, %s73
      %s75 = sphi 0, %s73
      %s76 = sphi 0, %s75
      %s90 = sphi 0, %s76
      %s94 = sphi 0, %s94
      %s96 = sphi 0, %s94
      %s97 = sphi 0, %s96
      %s111 = sphi 0, %s97
      %s115 = sphi 0, %s115
      %s117 = sphi 0, %s115
      %s118 = sphi 0, %s117
      %s132 = sphi 0, %s118
      %s136 = sphi 0, %s136
      %s138 = sphi 0, %s136
      %s139 = sphi 0, %s138
      %s153 = sphi 0, %s139
      %s157 = sphi 0, %s157
      %s159 = sphi 0, %s157
      %s160 = sphi 0, %s159
      %s174 = sphi 0, %s160
      %s178 = sphi 0, %s178
      %s180 = sphi 0, %s178
      %s181 = sphi 0, %s180
      %s195 = sphi 0, %s181
      %s199 = sphi 0, %s199
      %s201 = sphi 0, %s199
      %s202 = sphi 0, %s201
      %s216 = sphi 0, %s202
      %s220 = sphi 0, %s220
      %s222 = sphi 0, %s220
      %s223 = sphi 0, %s222
      %s237 = sphi 0, %s223
      %s241 = sphi 0, %s241
      %s243 = sphi 0, %s241
      %s244 = sphi 0, %s243
      %s258 = sphi 0, %s244
      %s262 = sphi 0, %s262
      %s264 = sphi 0, %s262
      %s265 = sphi 0, %s264
      %s279 = sphi 0, %s265
      %s283 = sphi 0, %s283
      %s285 = sphi 0, %s283
      %s286 = sphi 0, %s285
      %s300 = sphi 0, %s286
      %s304 = sphi 0, %s304
      %s306 = sphi 0, %s304
      %s307 = sphi 0, %s306
      %s321 = sphi 0, %s307
      %s325 = sphi 0, %s325
      %s327 = sphi 0, %s325
      %s328 = sphi 0, %s327
      %s342 = sphi 0, %s328
      %s346 = sphi 0, %s346
      %s348 = sphi 0, %s346
      %s349 = sphi 0, %s348
      %s363 = sphi 0, %s349
      %s371 = sphi 0, %s373
      %s374 = sphi 0, %s371
      %s375 = sphi 0, %s374
      %s391 = sphi 0, %s375
    $region4: #{tpu_custom_call.1} parent=1 // loop_header_branch
      %30 = sbr.rel (%p28) target = $region8
    $region5: #{tpu_custom_call.1} parent=1 // loop_body
      %s32 = ssub.s32 %s27, 1
      %s33 = ssub.s32 %s27, 2
      %s40 = sadd.s32 1, %s35
      %p41 = scmp.ge.s32.totalorder %s40, 2
      %s42 = scalar_select %p41, 0, %s40
      %s43 = sadd.s32 1, %s34
      %s44 = scalar_select %p41, %s43, %s34
      %p45 = scmp.ge.s32.totalorder %s44, 2
      %s46 = scalar_select %p45, 0, %s44
      %s47 = ssub.s32 %s34, %s46
      %p48 = scmp.eq.s32.totalorder %s47, 0
      %s50 = sadd.s32 %s49, 1
      %s51 = scalar_select %p48, %s49, %s50
      %p54 = pneg %p48
      %p55 = scmp.eq.s32.totalorder %s27, 3
      %p56 = por %p54, %p55
      %p57 = scmp.ne.s32.totalorder %s49, %s52
      %p58 = scmp.eq.s32.totalorder %s27, 0
      %p59 = por %p57, %p58
      %p60 = scmp.ne.s32.totalorder %s49, %s52
      %p61 = scmp.eq.s32.totalorder %s32, 3
      %p62 = por %p60, %p61
      %p63 = scmp.ne.s32.totalorder %s52, %s53
      %p64 = scmp.eq.s32.totalorder %s32, 0
      %p65 = por %p63, %p64
      %p66 = scmp.ne.s32.totalorder %s52, %s53
      %p67 = scmp.eq.s32.totalorder %s33, 3
      %p68 = por %p66, %p67
      %p70 = scmp.ne.s32.totalorder %s53, %s69
      %p71 = scmp.eq.s32.totalorder %s33, 0
      %p72 = por %p70, %p71
      %s74 = sadd.s32 %s73, 1
      %p77 = scmp.eq.s32.totalorder %s27, 3
      %p78 = scmp.ne.s32.totalorder %s73, %s75
      %p79 = scmp.eq.s32.totalorder %s27, 0
      %p80 = por %p78, %p79
      %p81 = scmp.ne.s32.totalorder %s73, %s75
      %p82 = scmp.eq.s32.totalorder %s32, 3
      %p83 = por %p81, %p82
      %p84 = scmp.ne.s32.totalorder %s75, %s76
      %p85 = scmp.eq.s32.totalorder %s32, 0
      %p86 = por %p84, %p85
      %p87 = scmp.ne.s32.totalorder %s75, %s76
      %p88 = scmp.eq.s32.totalorder %s33, 3
      %p89 = por %p87, %p88
      %p91 = scmp.ne.s32.totalorder %s76, %s90
      %p92 = scmp.eq.s32.totalorder %s33, 0
      %p93 = por %p91, %p92
      %s95 = sadd.s32 %s94, 1
      %p98 = scmp.eq.s32.totalorder %s27, 3
      %p99 = scmp.ne.s32.totalorder %s94, %s96
      %p100 = scmp.eq.s32.totalorder %s27, 0
      %p101 = por %p99, %p100
      %p102 = scmp.ne.s32.totalorder %s94, %s96
      %p103 = scmp.eq.s32.totalorder %s32, 3
      %p104 = por %p102, %p103
      %p105 = scmp.ne.s32.totalorder %s96, %s97
      %p106 = scmp.eq.s32.totalorder %s32, 0
      %p107 = por %p105, %p106
      %p108 = scmp.ne.s32.totalorder %s96, %s97
      %p109 = scmp.eq.s32.totalorder %s33, 3
      %p110 = por %p108, %p109
      %p112 = scmp.ne.s32.totalorder %s97, %s111
      %p113 = scmp.eq.s32.totalorder %s33, 0
      %p114 = por %p112, %p113
      %s116 = sadd.s32 %s115, 1
      %p119 = scmp.eq.s32.totalorder %s27, 3
      %p120 = scmp.ne.s32.totalorder %s115, %s117
      %p121 = scmp.eq.s32.totalorder %s27, 0
      %p122 = por %p120, %p121
      %p123 = scmp.ne.s32.totalorder %s115, %s117
      %p124 = scmp.eq.s32.totalorder %s32, 3
      %p125 = por %p123, %p124
      %p126 = scmp.ne.s32.totalorder %s117, %s118
      %p127 = scmp.eq.s32.totalorder %s32, 0
      %p128 = por %p126, %p127
      %p129 = scmp.ne.s32.totalorder %s117, %s118
      %p130 = scmp.eq.s32.totalorder %s33, 3
      %p131 = por %p129, %p130
      %p133 = scmp.ne.s32.totalorder %s118, %s132
      %p134 = scmp.eq.s32.totalorder %s33, 0
      %p135 = por %p133, %p134
      %s137 = sadd.s32 %s136, 1
      %p140 = scmp.eq.s32.totalorder %s27, 3
      %p141 = scmp.ne.s32.totalorder %s136, %s138
      %p142 = scmp.eq.s32.totalorder %s27, 0
      %p143 = por %p141, %p142
      %p144 = scmp.ne.s32.totalorder %s136, %s138
      %p145 = scmp.eq.s32.totalorder %s32, 3
      %p146 = por %p144, %p145
      %p147 = scmp.ne.s32.totalorder %s138, %s139
      %p148 = scmp.eq.s32.totalorder %s32, 0
      %p149 = por %p147, %p148
      %p150 = scmp.ne.s32.totalorder %s138, %s139
      %p151 = scmp.eq.s32.totalorder %s33, 3
      %p152 = por %p150, %p151
      %p154 = scmp.ne.s32.totalorder %s139, %s153
      %p155 = scmp.eq.s32.totalorder %s33, 0
      %p156 = por %p154, %p155
      %s158 = sadd.s32 %s157, 1
      %p161 = scmp.eq.s32.totalorder %s27, 3
      %p162 = scmp.ne.s32.totalorder %s157, %s159
      %p163 = scmp.eq.s32.totalorder %s27, 0
      %p164 = por %p162, %p163
      %p165 = scmp.ne.s32.totalorder %s157, %s159
      %p166 = scmp.eq.s32.totalorder %s32, 3
      %p167 = por %p165, %p166
      %p168 = scmp.ne.s32.totalorder %s159, %s160
      %p169 = scmp.eq.s32.totalorder %s32, 0
      %p170 = por %p168, %p169
      %p171 = scmp.ne.s32.totalorder %s159, %s160
      %p172 = scmp.eq.s32.totalorder %s33, 3
      %p173 = por %p171, %p172
      %p175 = scmp.ne.s32.totalorder %s160, %s174
      %p176 = scmp.eq.s32.totalorder %s33, 0
      %p177 = por %p175, %p176
      %s179 = sadd.s32 %s178, 1
      %p182 = scmp.eq.s32.totalorder %s27, 3
      %p183 = scmp.ne.s32.totalorder %s178, %s180
      %p184 = scmp.eq.s32.totalorder %s27, 0
      %p185 = por %p183, %p184
      %p186 = scmp.ne.s32.totalorder %s178, %s180
      %p187 = scmp.eq.s32.totalorder %s32, 3
      %p188 = por %p186, %p187
      %p189 = scmp.ne.s32.totalorder %s180, %s181
      %p190 = scmp.eq.s32.totalorder %s32, 0
      %p191 = por %p189, %p190
      %p192 = scmp.ne.s32.totalorder %s180, %s181
      %p193 = scmp.eq.s32.totalorder %s33, 3
      %p194 = por %p192, %p193
      %p196 = scmp.ne.s32.totalorder %s181, %s195
      %p197 = scmp.eq.s32.totalorder %s33, 0
      %p198 = por %p196, %p197
      %s200 = sadd.s32 %s199, 1
      %p203 = scmp.eq.s32.totalorder %s27, 3
      %p204 = scmp.ne.s32.totalorder %s199, %s201
      %p205 = scmp.eq.s32.totalorder %s27, 0
      %p206 = por %p204, %p205
      %p207 = scmp.ne.s32.totalorder %s199, %s201
      %p208 = scmp.eq.s32.totalorder %s32, 3
      %p209 = por %p207, %p208
      %p210 = scmp.ne.s32.totalorder %s201, %s202
      %p211 = scmp.eq.s32.totalorder %s32, 0
      %p212 = por %p210, %p211
      %p213 = scmp.ne.s32.totalorder %s201, %s202
      %p214 = scmp.eq.s32.totalorder %s33, 3
      %p215 = por %p213, %p214
      %p217 = scmp.ne.s32.totalorder %s202, %s216
      %p218 = scmp.eq.s32.totalorder %s33, 0
      %p219 = por %p217, %p218
      %s221 = sadd.s32 %s220, 1
      %p224 = scmp.eq.s32.totalorder %s27, 3
      %p225 = scmp.ne.s32.totalorder %s220, %s222
      %p226 = scmp.eq.s32.totalorder %s27, 0
      %p227 = por %p225, %p226
      %p228 = scmp.ne.s32.totalorder %s220, %s222
      %p229 = scmp.eq.s32.totalorder %s32, 3
      %p230 = por %p228, %p229
      %p231 = scmp.ne.s32.totalorder %s222, %s223
      %p232 = scmp.eq.s32.totalorder %s32, 0
      %p233 = por %p231, %p232
      %p234 = scmp.ne.s32.totalorder %s222, %s223
      %p235 = scmp.eq.s32.totalorder %s33, 3
      %p236 = por %p234, %p235
      %p238 = scmp.ne.s32.totalorder %s223, %s237
      %p239 = scmp.eq.s32.totalorder %s33, 0
      %p240 = por %p238, %p239
      %s242 = sadd.s32 %s241, 1
      %p245 = scmp.eq.s32.totalorder %s27, 3
      %p246 = scmp.ne.s32.totalorder %s241, %s243
      %p247 = scmp.eq.s32.totalorder %s27, 0
      %p248 = por %p246, %p247
      %p249 = scmp.ne.s32.totalorder %s241, %s243
      %p250 = scmp.eq.s32.totalorder %s32, 3
      %p251 = por %p249, %p250
      %p252 = scmp.ne.s32.totalorder %s243, %s244
      %p253 = scmp.eq.s32.totalorder %s32, 0
      %p254 = por %p252, %p253
      %p255 = scmp.ne.s32.totalorder %s243, %s244
      %p256 = scmp.eq.s32.totalorder %s33, 3
      %p257 = por %p255, %p256
      %p259 = scmp.ne.s32.totalorder %s244, %s258
      %p260 = scmp.eq.s32.totalorder %s33, 0
      %p261 = por %p259, %p260
      %s263 = sadd.s32 %s262, 1
      %p266 = scmp.eq.s32.totalorder %s27, 3
      %p267 = scmp.ne.s32.totalorder %s262, %s264
      %p268 = scmp.eq.s32.totalorder %s27, 0
      %p269 = por %p267, %p268
      %p270 = scmp.ne.s32.totalorder %s262, %s264
      %p271 = scmp.eq.s32.totalorder %s32, 3
      %p272 = por %p270, %p271
      %p273 = scmp.ne.s32.totalorder %s264, %s265
      %p274 = scmp.eq.s32.totalorder %s32, 0
      %p275 = por %p273, %p274
      %p276 = scmp.ne.s32.totalorder %s264, %s265
      %p277 = scmp.eq.s32.totalorder %s33, 3
      %p278 = por %p276, %p277
      %p280 = scmp.ne.s32.totalorder %s265, %s279
      %p281 = scmp.eq.s32.totalorder %s33, 0
      %p282 = por %p280, %p281
      %s284 = sadd.s32 %s283, 1
      %p287 = scmp.eq.s32.totalorder %s27, 3
      %p288 = scmp.ne.s32.totalorder %s283, %s285
      %p289 = scmp.eq.s32.totalorder %s27, 0
      %p290 = por %p288, %p289
      %p291 = scmp.ne.s32.totalorder %s283, %s285
      %p292 = scmp.eq.s32.totalorder %s32, 3
      %p293 = por %p291, %p292
      %p294 = scmp.ne.s32.totalorder %s285, %s286
      %p295 = scmp.eq.s32.totalorder %s32, 0
      %p296 = por %p294, %p295
      %p297 = scmp.ne.s32.totalorder %s285, %s286
      %p298 = scmp.eq.s32.totalorder %s33, 3
      %p299 = por %p297, %p298
      %p301 = scmp.ne.s32.totalorder %s286, %s300
      %p302 = scmp.eq.s32.totalorder %s33, 0
      %p303 = por %p301, %p302
      %s305 = sadd.s32 %s304, 1
      %p308 = scmp.eq.s32.totalorder %s27, 3
      %p309 = scmp.ne.s32.totalorder %s304, %s306
      %p310 = scmp.eq.s32.totalorder %s27, 0
      %p311 = por %p309, %p310
      %p312 = scmp.ne.s32.totalorder %s304, %s306
      %p313 = scmp.eq.s32.totalorder %s32, 3
      %p314 = por %p312, %p313
      %p315 = scmp.ne.s32.totalorder %s306, %s307
      %p316 = scmp.eq.s32.totalorder %s32, 0
      %p317 = por %p315, %p316
      %p318 = scmp.ne.s32.totalorder %s306, %s307
      %p319 = scmp.eq.s32.totalorder %s33, 3
      %p320 = por %p318, %p319
      %p322 = scmp.ne.s32.totalorder %s307, %s321
      %p323 = scmp.eq.s32.totalorder %s33, 0
      %p324 = por %p322, %p323
      %s326 = sadd.s32 %s325, 1
      %p329 = scmp.eq.s32.totalorder %s27, 3
      %p330 = scmp.ne.s32.totalorder %s325, %s327
      %p331 = scmp.eq.s32.totalorder %s27, 0
      %p332 = por %p330, %p331
      %p333 = scmp.ne.s32.totalorder %s325, %s327
      %p334 = scmp.eq.s32.totalorder %s32, 3
      %p335 = por %p333, %p334
      %p336 = scmp.ne.s32.totalorder %s327, %s328
      %p337 = scmp.eq.s32.totalorder %s32, 0
      %p338 = por %p336, %p337
      %p339 = scmp.ne.s32.totalorder %s327, %s328
      %p340 = scmp.eq.s32.totalorder %s33, 3
      %p341 = por %p339, %p340
      %p343 = scmp.ne.s32.totalorder %s328, %s342
      %p344 = scmp.eq.s32.totalorder %s33, 0
      %p345 = por %p343, %p344
      %s347 = sadd.s32 %s346, 1
      %p350 = scmp.eq.s32.totalorder %s27, 3
      %p351 = scmp.ne.s32.totalorder %s346, %s348
      %p352 = scmp.eq.s32.totalorder %s27, 0
      %p353 = por %p351, %p352
      %p354 = scmp.ne.s32.totalorder %s346, %s348
      %p355 = scmp.eq.s32.totalorder %s32, 3
      %p356 = por %p354, %p355
      %p357 = scmp.ne.s32.totalorder %s348, %s349
      %p358 = scmp.eq.s32.totalorder %s32, 0
      %p359 = por %p357, %p358
      %p360 = scmp.ne.s32.totalorder %s348, %s349
      %p361 = scmp.eq.s32.totalorder %s33, 3
      %p362 = por %p360, %p361
      %p364 = scmp.ne.s32.totalorder %s349, %s363
      %p365 = scmp.eq.s32.totalorder %s33, 0
      %p366 = por %p364, %p365
      %s367 = ssub.s32 %s34, %s46
      %s368 = ssub.s32 %s35, %s42
      %s369 = sor.u32 %s367, %s368
      %p370 = scmp.eq.s32.totalorder %s369, 0
      %s372 = sadd.s32 %s371, 1
      %s373 = scalar_select %p370, %s371, %s372
      %p376 = pneg %p370
      %p377 = scmp.eq.s32.totalorder %s27, 3
      %p378 = por %p376, %p377
      %p379 = scmp.ne.s32.totalorder %s371, %s374
      %p380 = scmp.eq.s32.totalorder %s27, 0
      %p381 = por %p379, %p380
      %p382 = scmp.ne.s32.totalorder %s371, %s374
      %p383 = scmp.eq.s32.totalorder %s32, 3
      %p384 = por %p382, %p383
      %p385 = scmp.ne.s32.totalorder %s374, %s375
      %p386 = scmp.eq.s32.totalorder %s32, 0
      %p387 = por %p385, %p386
      %p388 = scmp.ne.s32.totalorder %s374, %s375
      %p389 = scmp.eq.s32.totalorder %s33, 3
      %p390 = por %p388, %p389
      %p392 = scmp.ne.s32.totalorder %s375, %s391
      %p393 = scmp.eq.s32.totalorder %s33, 0
      %p394 = por %p392, %p393
      %p395 = scmp.le.s32.totalorder 1, %s27
      %p396 = scmp.lt.s32.totalorder %s27, 5
      %p397 = pnand %p395, %p396
      %p398 = pneg %p397
      // Predicated region
      $region9: #{tpu_custom_call.1} parent=5 // pred_check
        _
      $region10: #{tpu_custom_call.1} parent=5 // pred_check_branch
        %400 = sbr.rel (%p397) target = $region12
      $region11: #{tpu_custom_call.1} parent=5 // pred_region
        %s401 = ssub.s32 %s27, 1
        // Predicated region
        $region13: #{tpu_custom_call.1} parent=11 // pred_check
          %p402 = pneg %p86
        $region14: #{tpu_custom_call.1} parent=11 // pred_check_branch
          %404 = sbr.rel (%p402) target = $region16
        $region15: #{tpu_custom_call.1} parent=11 // pred_region
          _
        $region16: #{tpu_custom_call.1} parent=11 // pred_fallthru
          _
        // Predicated region
        $region17: #{tpu_custom_call.1} parent=11 // pred_check
          %p405 = pneg %p107
        $region18: #{tpu_custom_call.1} parent=11 // pred_check_branch
          %407 = sbr.rel (%p405) target = $region20
        $region19: #{tpu_custom_call.1} parent=11 // pred_region
          _
        $region20: #{tpu_custom_call.1} parent=11 // pred_fallthru
          _
        // Predicated region
        $region21: #{tpu_custom_call.1} parent=11 // pred_check
          %p408 = pneg %p128
        $region22: #{tpu_custom_call.1} parent=11 // pred_check_branch
          %410 = sbr.rel (%p408) target = $region24
        $region23: #{tpu_custom_call.1} parent=11 // pred_region
          _
        $region24: #{tpu_custom_call.1} parent=11 // pred_fallthru
          _
        // Predicated region
        $region25: #{tpu_custom_call.1} parent=11 // pred_check
          %p411 = pneg %p149
        $region26: #{tpu_custom_call.1} parent=11 // pred_check_branch
          %413 = sbr.rel (%p411) target = $region28
        $region27: #{tpu_custom_call.1} parent=11 // pred_region
          %s415 = ssub.s32 16, 16
          %416 = vsyncadd [#allocation5], %s415
          %s418 = sshll.u32 [#allocation4], 4
          %s419 = int_to_ptr.vmem [resolvable:$true] %s418
          %421 = dma.hbm_to_vmem [thread:$0]  %s4, 16, %s419, [#allocation5]
        $region28: #{tpu_custom_call.1} parent=11 // pred_fallthru
          _
        // Predicated region
        $region29: #{tpu_custom_call.1} parent=11 // pred_check
          %p422 = pneg %p170
        $region30: #{tpu_custom_call.1} parent=11 // pred_check_branch
          %424 = sbr.rel (%p422) target = $region32
        $region31: #{tpu_custom_call.1} parent=11 // pred_region
          _
        $region32: #{tpu_custom_call.1} parent=11 // pred_fallthru
          _
        // Predicated region
        $region33: #{tpu_custom_call.1} parent=11 // pred_check
          %p425 = pneg %p191
        $region34: #{tpu_custom_call.1} parent=11 // pred_check_branch
          %427 = sbr.rel (%p425) target = $region36
        $region35: #{tpu_custom_call.1} parent=11 // pred_region
          %s429 = ssub.s32 16, 16
          %430 = vsyncadd [#allocation8], %s429
          %s432 = sshll.u32 [#allocation7], 4
          %s433 = int_to_ptr.vmem [resolvable:$true] %s432
          %435 = dma.hbm_to_vmem [thread:$0]  %s6, 16, %s433, [#allocation8]
        $region36: #{tpu_custom_call.1} parent=11 // pred_fallthru
          _
        // Predicated region
        $region37: #{tpu_custom_call.1} parent=11 // pred_check
          %p436 = pneg %p212
        $region38: #{tpu_custom_call.1} parent=11 // pred_check_branch
          %438 = sbr.rel (%p436) target = $region40
        $region39: #{tpu_custom_call.1} parent=11 // pred_region
          _
        $region40: #{tpu_custom_call.1} parent=11 // pred_fallthru
          _
        // Predicated region
        $region41: #{tpu_custom_call.1} parent=11 // pred_check
          %p439 = pneg %p233
        $region42: #{tpu_custom_call.1} parent=11 // pred_check_branch
          %441 = sbr.rel (%p439) target = $region44
        $region43: #{tpu_custom_call.1} parent=11 // pred_region
          %s443 = ssub.s32 16, 16
          %444 = vsyncadd [#allocation8], %s443
          %s446 = sshll.u32 [#allocation9], 4
          %s447 = int_to_ptr.vmem [resolvable:$true] %s446
          %449 = dma.hbm_to_vmem [thread:$0]  %s8, 16, %s447, [#allocation8]
        $region44: #{tpu_custom_call.1} parent=11 // pred_fallthru
          _
        // Predicated region
        $region45: #{tpu_custom_call.1} parent=11 // pred_check
          %p450 = pneg %p254
        $region46: #{tpu_custom_call.1} parent=11 // pred_check_branch
          %452 = sbr.rel (%p450) target = $region48
        $region47: #{tpu_custom_call.1} parent=11 // pred_region
          %s454 = ssub.s32 16, 16
          %455 = vsyncadd [#allocation11], %s454
          %s457 = sshll.u32 [#allocation10], 4
          %s458 = int_to_ptr.vmem [resolvable:$true] %s457
          %460 = dma.hbm_to_vmem [thread:$0]  %s9, 16, %s458, [#allocation11]
        $region48: #{tpu_custom_call.1} parent=11 // pred_fallthru
          _
        // Predicated region
        $region49: #{tpu_custom_call.1} parent=11 // pred_check
          %p461 = pneg %p275
        $region50: #{tpu_custom_call.1} parent=11 // pred_check_branch
          %463 = sbr.rel (%p461) target = $region52
        $region51: #{tpu_custom_call.1} parent=11 // pred_region
          _
        $region52: #{tpu_custom_call.1} parent=11 // pred_fallthru
          _
        // Predicated region
        $region53: #{tpu_custom_call.1} parent=11 // pred_check
          %p464 = pneg %p296
        $region54: #{tpu_custom_call.1} parent=11 // pred_check_branch
          %466 = sbr.rel (%p464) target = $region56
        $region55: #{tpu_custom_call.1} parent=11 // pred_region
          _
        $region56: #{tpu_custom_call.1} parent=11 // pred_fallthru
          _
        // Predicated region
        $region57: #{tpu_custom_call.1} parent=11 // pred_check
          %p467 = pneg %p317
        $region58: #{tpu_custom_call.1} parent=11 // pred_check_branch
          %469 = sbr.rel (%p467) target = $region60
        $region59: #{tpu_custom_call.1} parent=11 // pred_region
          _
        $region60: #{tpu_custom_call.1} parent=11 // pred_fallthru
          _
        // Predicated region
        $region61: #{tpu_custom_call.1} parent=11 // pred_check
          %p470 = pneg %p338
        $region62: #{tpu_custom_call.1} parent=11 // pred_check_branch
          %472 = sbr.rel (%p470) target = $region64
        $region63: #{tpu_custom_call.1} parent=11 // pred_region
          _
        $region64: #{tpu_custom_call.1} parent=11 // pred_fallthru
          _
        // Predicated region
        $region65: #{tpu_custom_call.1} parent=11 // pred_check
          %p473 = pneg %p359
        $region66: #{tpu_custom_call.1} parent=11 // pred_check_branch
          %475 = sbr.rel (%p473) target = $region68
        $region67: #{tpu_custom_call.1} parent=11 // pred_region
          _
        $region68: #{tpu_custom_call.1} parent=11 // pred_fallthru
          _
      $region12: #{tpu_custom_call.1} parent=5 // pred_fallthru
        _
      %p476 = scmp.lt.s32.totalorder %s27, 4
      // Predicated region
      $region69: #{tpu_custom_call.1} parent=5 // pred_check
        %p477 = pneg %p476
      $region70: #{tpu_custom_call.1} parent=5 // pred_check_branch
        %479 = sbr.rel (%p477) target = $region72
      $region71: #{tpu_custom_call.1} parent=5 // pred_region
        // Predicated region
        $region73: #{tpu_custom_call.1} parent=71 // pred_check
          %p480 = pneg %p59
        $region74: #{tpu_custom_call.1} parent=71 // pred_check_branch
          %482 = sbr.rel (%p480) target = $region76
        $region75: #{tpu_custom_call.1} parent=71 // pred_region
          %p483 = scmp.lt.s32.totalorder %s34, 1
          %s484 = scalar_select %p483, %s34, 1
          %s485 = smul.addr %s484, 2
          %s486 = smul.addr %s485, 8
          %s487 = scalar_lea.vmem %s0, %s486
        $region76: #{tpu_custom_call.1} parent=71 // pred_fallthru
          _
      $region72: #{tpu_custom_call.1} parent=5 // pred_fallthru
        _
      %p488 = scmp.le.s32.totalorder 1, %s27
      %p489 = scmp.lt.s32.totalorder %s27, 5
      %p490 = pnand %p488, %p489
      %p491 = pneg %p490
      // Predicated region
      $region77: #{tpu_custom_call.1} parent=5 // pred_check
        _
      $region78: #{tpu_custom_call.1} parent=5 // pred_check_branch
        %493 = sbr.rel (%p490) target = $region80
      $region79: #{tpu_custom_call.1} parent=5 // pred_region
        %s494 = ssub.s32 %s27, 1
        // Predicated region
        $region81: #{tpu_custom_call.1} parent=79 // pred_check
          %p495 = pneg %p149
        $region82: #{tpu_custom_call.1} parent=79 // pred_check_branch
          %497 = sbr.rel (%p495) target = $region84
        $region83: #{tpu_custom_call.1} parent=79 // pred_region
          %498 = dma.done [#allocation5], 16
        $region84: #{tpu_custom_call.1} parent=79 // pred_fallthru
          _
        // Predicated region
        $region85: #{tpu_custom_call.1} parent=79 // pred_check
          %p499 = pneg %p191
        $region86: #{tpu_custom_call.1} parent=79 // pred_check_branch
          %501 = sbr.rel (%p499) target = $region88
        $region87: #{tpu_custom_call.1} parent=79 // pred_region
          %502 = dma.done [#allocation8], 16
        $region88: #{tpu_custom_call.1} parent=79 // pred_fallthru
          _
        // Predicated region
        $region89: #{tpu_custom_call.1} parent=79 // pred_check
          %p503 = pneg %p233
        $region90: #{tpu_custom_call.1} parent=79 // pred_check_branch
          %505 = sbr.rel (%p503) target = $region92
        $region91: #{tpu_custom_call.1} parent=79 // pred_region
          %506 = dma.done [#allocation8], 16
        $region92: #{tpu_custom_call.1} parent=79 // pred_fallthru
          _
        // Predicated region
        $region93: #{tpu_custom_call.1} parent=79 // pred_check
          %p507 = pneg %p254
        $region94: #{tpu_custom_call.1} parent=79 // pred_check_branch
          %509 = sbr.rel (%p507) target = $region96
        $region95: #{tpu_custom_call.1} parent=79 // pred_region
          %510 = dma.done [#allocation11], 16
        $region96: #{tpu_custom_call.1} parent=79 // pred_fallthru
          _
        %p511 = scmp.lt.s32.totalorder %s36, 1
        %s512 = scalar_select %p511, %s36, 1
        %s513 = smul.addr %s512, 2
        %s514 = smul.addr %s513, 8
        %s515 = scalar_lea.vmem %s0, %s514
        %p516 = pneg %p65
        %p517 = pneg %p62
        %p518 = pneg %p86
        %p519 = pneg %p83
        %p520 = pneg %p107
        %p521 = pneg %p104
        %p522 = pneg %p128
        %p523 = pneg %p125
        %p524 = pneg %p149
        %p525 = pneg %p146
        %p526 = pneg %p170
        %p527 = pneg %p167
        %p528 = pneg %p191
        %p529 = pneg %p188
        %p530 = pneg %p212
        %p531 = pneg %p209
        %p532 = pneg %p233
        %p533 = pneg %p230
        %p534 = pneg %p254
        %p535 = pneg %p251
        %p536 = pneg %p275
        %p537 = pneg %p272
        %p538 = pneg %p296
        %p539 = pneg %p293
        %p540 = pneg %p317
        %p541 = pneg %p314
        %p542 = pneg %p338
        %p543 = pneg %p335
        %p544 = pneg %p359
        %p545 = pneg %p356
        %p546 = pneg %p387
        %p547 = pneg %p384
        %s548 = sand.u32 %s374, 1
        %s549 = scalar_lea.sflag [#allocation6], %s548
        %s550 = sand.u32 %s374, 1
        %s551 = smul.addr %s550, 8
        %s552 = scalar_lea.vmem [#allocation12], %s551
        %p553 = scmp.lt.s32.totalorder %s36, 1
        %s554 = scalar_select %p553, %s36, 1
        %s555 = smul.addr %s554, 2
        %s556 = smul.addr %s555, 8
        %s557 = scalar_lea.vmem %s0, %s556
        %p563 = scmp.eq.s32.totalorder %s37, 0
        // Predicated region
        $region97: #{tpu_custom_call.1} parent=79 // pred_check
          %p564 = pneg %p563
        $region98: #{tpu_custom_call.1} parent=79 // pred_check_branch
          %566 = sbr.rel (%p564) target = $region100
        $region99: #{tpu_custom_call.1} parent=79 // pred_region
          %v567 = vld [vmem:[%s557] sm:$0xff]
          %v568 = vld [vmem:[%s557 + $0x8] sm:$0xff]
          %v569 = vpack.c.bf16 %v568, %v567
          %v570 = vld [vmem:[%s5] sm:$0xf]
          %v571 = vld [vmem:[%s5 + $0x4] sm:$0xf]
          %v572 = vld [vmem:[%s5 + $0x8] sm:$0xf]
          %v573 = vld [vmem:[%s5 + $0xc] sm:$0xf]
          %v574 = vld [vmem:[#allocation7] sm:$0x1]
          %v576 = vlaneseq
          %v577 = vshrl.u32 %v576, 7
          %v578 = vsub.s32 0, %v577
          %v579 = vrot.slane %v574, %v578
          %v585 = vunpack.c.l.b16 %v570
          %v586 = vunpack.c.l.b16 %v571
          %v587 = vunpack.c.l.b16 %v572
          %v588 = vunpack.c.l.b16 %v573
          %v589 = vpack.c.b16 %v586, %v585
          %v590 = vpack.c.b16 %v588, %v587
          %vm593 = vcmask 261120
          %v595 = vsel %vm593, %v569, 0
          %597 = vmatprep.subr.bf16.mxu0 0
          %598 = vmatpush1.bf16.msra.mxu0 %v589
          %599 = vmatprep.subr.bf16.mxu0 0
          %600 = vmatpush1.bf16.msra.mxu0 %v590
          %601 = vmatprep.subr.bf16.mxu0 0
          %602 = vmatpush1.bf16.msra.mxu0 0
          %603 = vmatprep.subr.bf16.mxu0 0
          %604 = vmatpush1.bf16.msra.mxu0 0
          %605 = vmatprep.subr.bf16.mxu0 0
          %606 = vmatpush1.bf16.msra.mxu0 0
          %607 = vmatprep.subr.bf16.mxu0 0
          %608 = vmatpush1.bf16.msra.mxu0 0
          %609 = vmatprep.subr.bf16.mxu0 0
          %610 = vmatpush1.bf16.msra.mxu0 0
          %611 = vmatprep.subr.bf16.mxu0 0
          %612 = vmatpush1.bf16.msra.mxu0 0
          %613 = vmatprep.subr.bf16.mxu0 0
          %614 = vmatpush1.bf16.msra.mxu0 0
          %615 = vmatprep.subr.bf16.mxu0 0
          %616 = vmatpush1.bf16.msra.mxu0 0
          %617 = vmatprep.subr.bf16.mxu0 0
          %618 = vmatpush1.bf16.msra.mxu0 0
          %619 = vmatprep.subr.bf16.mxu0 0
          %620 = vmatpush1.bf16.msra.mxu0 0
          %621 = vmatprep.subr.bf16.mxu0 0
          %622 = vmatpush1.bf16.msra.mxu0 0
          %623 = vmatprep.subr.bf16.mxu0 0
          %624 = vmatpush1.bf16.msra.mxu0 0
          %625 = vmatprep.subr.bf16.mxu0 0
          %626 = vmatpush1.bf16.msra.mxu0 0
          %627 = vmatprep.subr.bf16.mxu0 0
          %628 = vmatpush1.bf16.msra.mxu0 0
          %629 = vmatprep.mubr.bf16.mxu0 0
          %630 = vmatmul.mubr.bf16.gmra.mrb[0].mxu0 %v595
          %v631 = vpop.f32.mrb[0].mxu0
          %v632 = vadd.f32 %v579, %v631
          %v633 = vpop.f32.mrb[0].mxu0
          %v634 = vpop.f32.mrb[0].mxu0
          %v635 = vadd.f32 %v579, %v634
          %v636 = vpop.f32.mrb[0].mxu0
          %637 = vdwg.mxu0
          %640 = vrot.lane.b32.xlu0 %v632, 120
          %v641 = vpop.permute.xlu0 %640
          %642 = vrot.lane.b32.xlu0 %v635, 120
          %v643 = vpop.permute.xlu0 %642
          %646 = vrot.lane.b32.xlu0 %v632, 112
          %v647 = vpop.permute.xlu0 %646
          %648 = vrot.lane.b32.xlu0 %v635, 112
          %v649 = vpop.permute.xlu0 %648
          %652 = vrot.lane.b32.xlu0 %v632, 104
          %v653 = vpop.permute.xlu0 %652
          %654 = vrot.lane.b32.xlu0 %v635, 104
          %v655 = vpop.permute.xlu0 %654
          %v658 = vpack.c.bf16 %v635, %v632
          %v659 = vpack.c.bf16 %v643, %v641
          %v660 = vpack.c.bf16 %v649, %v647
          %v661 = vpack.c.bf16 %v655, %v653
          %vm662 = vcmask 64512
          %663 = vst.msk [vmem:[#allocation2] sm:$0xff] %vm662, %v658
          %664 = vst.msk [vmem:[#allocation2 + $0x8] sm:$0xff] %vm662, %v659
          %665 = vst.msk [vmem:[#allocation2 + $0x10] sm:$0xff] %vm662, %v660
          %666 = vst.msk [vmem:[#allocation2 + $0x18] sm:$0xff] %vm662, %v661
          %667 = vrot.lane.b32.xlu0 %v632, 96
          %v668 = vpop.permute.xlu0 %667
          %669 = vrot.lane.b32.xlu0 %v635, 96
          %v670 = vpop.permute.xlu0 %669
          %673 = vxpose.xlu0.b32.start [1/16] %v668, 128
          %674 = vxpose.xlu0.b32.cont [2/16] %v670, 128
          %675 = vxpose.xlu0.b32.cont [3/16] 0.0, 128
          %676 = vxpose.xlu0.b32.cont [4/16] 0.0, 128
          %677 = vxpose.xlu0.b32.cont [5/16] 0.0, 128
          %678 = vxpose.xlu0.b32.cont [6/16] 0.0, 128
          %679 = vxpose.xlu0.b32.cont [7/16] 0.0, 128
          %680 = vxpose.xlu0.b32.cont [8/16] 0.0, 128
          %681 = vxpose.xlu0.b32.cont [9/16] 0.0, 128
          %682 = vxpose.xlu0.b32.cont [10/16] 0.0, 128
          %683 = vxpose.xlu0.b32.cont [11/16] 0.0, 128
          %684 = vxpose.xlu0.b32.cont [12/16] 0.0, 128
          %685 = vxpose.xlu0.b32.cont [13/16] 0.0, 128
          %686 = vxpose.xlu0.b32.cont [14/16] 0.0, 128
          %687 = vxpose.xlu0.b32.cont [15/16] 0.0, 128
          %688 = vxpose.xlu0.b32.end [16/16] 0.0, 128
          %v689 = vpop.trf.xlu0
          %v690 = vpop.trf.xlu0
          %v691 = vpop.trf.xlu0
          %v692 = vpop.trf.xlu0
          %v693 = vpop.trf.xlu0
          %v694 = vpop.trf.xlu0
          %v695 = vpop.trf.xlu0
          %v696 = vpop.trf.xlu0
          %v697 = vpop.trf.xlu0
          %v698 = vpop.trf.xlu0
          %v699 = vpop.trf.xlu0
          %v700 = vpop.trf.xlu0
          %v701 = vpop.trf.xlu0
          %v702 = vpop.trf.xlu0
          %v703 = vpop.trf.xlu0
          %v704 = vpop.trf.xlu0
          %v705 = vpack.c.bf16 %v689, %v689
          %v706 = vpack.c.bf16 %v690, %v690
          %v707 = vpack.c.bf16 %v691, %v691
          %v708 = vpack.c.bf16 %v692, %v692
          %vm709 = vcmask 125952
          %710 = vst.msk [vmem:[#allocation3] sm:$0xf] %vm709, %v705
          %711 = vst.msk [vmem:[#allocation3 + $0x4] sm:$0xf] %vm709, %v706
          %712 = vst.msk [vmem:[#allocation3 + $0x8] sm:$0xf] %vm709, %v707
          %713 = vst.msk [vmem:[#allocation3 + $0xc] sm:$0xf] %vm709, %v708
        $region100: #{tpu_custom_call.1} parent=79 // pred_fallthru
          _
        %s714 = smul.u32 %s37, 8
        %s715 = scalar_lea.vmem %s557, %s714
        %v716 = vld [vmem:[%s715] sm:$0xff]
        %v717 = vld [vmem:[%s1] sm:$0x1]
        %v718 = vld [vmem:[%s2] sm:$0x1]
        %vm719 = vcmask 261120
        %v720 = vsel %vm719, %v716, 0.0
        %721 = vadd.xlane.f32.xlu0 %v720
        %v722 = vpop.xlane.xlu0 %721
        %v723 = vrcp.pop 32.0
        %v724 = vmul.f32 %v722, %v723
        %v725 = vsub.f32 %v716, %v724
        %v726 = vmul.f32 %v725, %v725
        %v727 = vsel %vm719, %v726, 0.0
        %728 = vadd.xlane.f32.xlu0 %v727
        %v729 = vpop.xlane.xlu0 %728
        %v730 = vmul.f32 %v729, %v723
        %v731 = vadd.f32 %v730, 1e-05
        %v732 = vrsqrt.pop %v731
        %v733 = vmul.f32 %v725, %v732
        %v735 = vlaneseq
        %v736 = vshrl.u32 %v735, 7
        %v737 = vsub.s32 0, %v736
        %v738 = vrot.slane %v717, %v737
        %v740 = vmul.f32 %v733, %v738
        %v742 = vlaneseq
        %v743 = vshrl.u32 %v742, 7
        %v744 = vsub.s32 0, %v743
        %v745 = vrot.slane %v718, %v744
        %v747 = vadd.f32 %v740, %v745
        %v748 = vpack.c.bf16 %v716, %v716
        %v749 = vld [vmem:[%s3] sm:$0xf]
        %v750 = vld [vmem:[%s3 + $0x4] sm:$0xf]
        %v751 = vld [vmem:[%s3 + $0x8] sm:$0xf]
        %v752 = vld [vmem:[%s3 + $0xc] sm:$0xf]
        %v753 = vld [vmem:[#allocation4] sm:$0x1]
        %v755 = vlaneseq
        %v756 = vshrl.u32 %v755, 7
        %v757 = vsub.s32 0, %v756
        %v758 = vrot.slane %v753, %v757
        %v764 = vunpack.c.l.b16 %v749
        %v765 = vunpack.c.l.b16 %v750
        %v766 = vunpack.c.l.b16 %v751
        %v767 = vunpack.c.l.b16 %v752
        %v768 = vpack.c.b16 %v765, %v764
        %v769 = vpack.c.b16 %v767, %v766
        %v773 = vsel %vm719, %v748, 0
        %775 = vmatprep.subr.bf16.mxu0 0
        %776 = vmatpush1.bf16.msra.mxu0 %v768
        %777 = vmatprep.subr.bf16.mxu0 0
        %778 = vmatpush1.bf16.msra.mxu0 %v769
        %779 = vmatprep.subr.bf16.mxu0 0
        %780 = vmatpush1.bf16.msra.mxu0 0
        %781 = vmatprep.subr.bf16.mxu0 0
        %782 = vmatpush1.bf16.msra.mxu0 0
        %783 = vmatprep.subr.bf16.mxu0 0
        %784 = vmatpush1.bf16.msra.mxu0 0
        %785 = vmatprep.subr.bf16.mxu0 0
        %786 = vmatpush1.bf16.msra.mxu0 0
        %787 = vmatprep.subr.bf16.mxu0 0
        %788 = vmatpush1.bf16.msra.mxu0 0
        %789 = vmatprep.subr.bf16.mxu0 0
        %790 = vmatpush1.bf16.msra.mxu0 0
        %791 = vmatprep.subr.bf16.mxu0 0
        %792 = vmatpush1.bf16.msra.mxu0 0
        %793 = vmatprep.subr.bf16.mxu0 0
        %794 = vmatpush1.bf16.msra.mxu0 0
        %795 = vmatprep.subr.bf16.mxu0 0
        %796 = vmatpush1.bf16.msra.mxu0 0
        %797 = vmatprep.subr.bf16.mxu0 0
        %798 = vmatpush1.bf16.msra.mxu0 0
        %799 = vmatprep.subr.bf16.mxu0 0
        %800 = vmatpush1.bf16.msra.mxu0 0
        %801 = vmatprep.subr.bf16.mxu0 0
        %802 = vmatpush1.bf16.msra.mxu0 0
        %803 = vmatprep.subr.bf16.mxu0 0
        %804 = vmatpush1.bf16.msra.mxu0 0
        %805 = vmatprep.subr.bf16.mxu0 0
        %806 = vmatpush1.bf16.msra.mxu0 0
        %807 = vmatprep.mubr.bf16.mxu0 0
        %808 = vmatmul.mubr.bf16.gmra.mrb[0].mxu0 %v773
        %v809 = vpop.f32.mrb[0].mxu0
        %v810 = vadd.f32 %v758, %v809
        %v811 = vpop.f32.mrb[0].mxu0
        %v812 = vpop.f32.mrb[0].mxu0
        %v813 = vpop.f32.mrb[0].mxu0
        %814 = vdwg.mxu0
        %815 = vxpose.xlu0.b32.start [1/16] %v810, 128
        %816 = vxpose.xlu0.b32.cont [2/16] 0.0, 128
        %817 = vxpose.xlu0.b32.cont [3/16] 0.0, 128
        %818 = vxpose.xlu0.b32.cont [4/16] 0.0, 128
        %819 = vxpose.xlu0.b32.cont [5/16] 0.0, 128
        %820 = vxpose.xlu0.b32.cont [6/16] 0.0, 128
        %821 = vxpose.xlu0.b32.cont [7/16] 0.0, 128
        %822 = vxpose.xlu0.b32.cont [8/16] 0.0, 128
        %823 = vxpose.xlu0.b32.cont [9/16] 0.0, 128
        %824 = vxpose.xlu0.b32.cont [10/16] 0.0, 128
        %825 = vxpose.xlu0.b32.cont [11/16] 0.0, 128
        %826 = vxpose.xlu0.b32.cont [12/16] 0.0, 128
        %827 = vxpose.xlu0.b32.cont [13/16] 0.0, 128
        %828 = vxpose.xlu0.b32.cont [14/16] 0.0, 128
        %829 = vxpose.xlu0.b32.cont [15/16] 0.0, 128
        %830 = vxpose.xlu0.b32.end [16/16] 0.0, 128
        %v831 = vpop.trf.xlu0
        %v832 = vpop.trf.xlu0
        %v833 = vpop.trf.xlu0
        %v834 = vpop.trf.xlu0
        %v835 = vpop.trf.xlu0
        %v836 = vpop.trf.xlu0
        %v837 = vpop.trf.xlu0
        %v838 = vpop.trf.xlu0
        %v839 = vpop.trf.xlu0
        %v840 = vpop.trf.xlu0
        %v841 = vpop.trf.xlu0
        %v842 = vpop.trf.xlu0
        %v843 = vpop.trf.xlu0
        %v844 = vpop.trf.xlu0
        %v845 = vpop.trf.xlu0
        %v846 = vpop.trf.xlu0
        %v847 = vpack.c.bf16 %v831, %v831
        %v848 = vpack.c.bf16 %v832, %v832
        %v849 = vpack.c.bf16 %v833, %v833
        %v850 = vpack.c.bf16 %v834, %v834
        %v851 = vld [vmem:[#allocation2] sm:$0xff]
        %v852 = vld [vmem:[#allocation2 + $0x8] sm:$0xff]
        %v853 = vld [vmem:[#allocation2 + $0x10] sm:$0xff]
        %v854 = vld [vmem:[#allocation2 + $0x18] sm:$0xff]
        %vm855 = vcmask 64512
        %v857 = vsel %vm855, %v851, 0
        %vm859 = vcmask 1043456
        %v861 = vsel %vm859, %v847, 0
        %863 = vmatprep.subr.bf16.mxu0 0
        %864 = vmatpush1.bf16.msra.mxu0 %v861
        %865 = vmatprep.subr.bf16.mxu0 0
        %866 = vmatpush1.bf16.msra.mxu0 0
        %867 = vmatprep.subr.bf16.mxu0 0
        %868 = vmatpush1.bf16.msra.mxu0 0
        %869 = vmatprep.subr.bf16.mxu0 0
        %870 = vmatpush1.bf16.msra.mxu0 0
        %871 = vmatprep.subr.bf16.mxu0 0
        %872 = vmatpush1.bf16.msra.mxu0 0
        %873 = vmatprep.subr.bf16.mxu0 0
        %874 = vmatpush1.bf16.msra.mxu0 0
        %875 = vmatprep.subr.bf16.mxu0 0
        %876 = vmatpush1.bf16.msra.mxu0 0
        %877 = vmatprep.subr.bf16.mxu0 0
        %878 = vmatpush1.bf16.msra.mxu0 0
        %879 = vmatprep.subr.bf16.mxu0 0
        %880 = vmatpush1.bf16.msra.mxu0 0
        %881 = vmatprep.subr.bf16.mxu0 0
        %882 = vmatpush1.bf16.msra.mxu0 0
        %883 = vmatprep.subr.bf16.mxu0 0
        %884 = vmatpush1.bf16.msra.mxu0 0
        %885 = vmatprep.subr.bf16.mxu0 0
        %886 = vmatpush1.bf16.msra.mxu0 0
        %887 = vmatprep.subr.bf16.mxu0 0
        %888 = vmatpush1.bf16.msra.mxu0 0
        %889 = vmatprep.subr.bf16.mxu0 0
        %890 = vmatpush1.bf16.msra.mxu0 0
        %891 = vmatprep.subr.bf16.mxu0 0
        %892 = vmatpush1.bf16.msra.mxu0 0
        %893 = vmatprep.subr.bf16.mxu0 0
        %894 = vmatpush1.bf16.msra.mxu0 0
        %895 = vmatprep.mubr.bf16.mxu0 0
        %896 = vmatmul.mubr.bf16.gmra.mrb[0].mxu0 %v857
        %v897 = vpop.f32.mrb[0].mxu0
        %v898 = vadd.f32 0.0, %v897
        %v899 = vpop.f32.mrb[0].mxu0
        %v900 = vpop.f32.mrb[0].mxu0
        %v901 = vadd.f32 0.0, %v900
        %v902 = vpop.f32.mrb[0].mxu0
        %903 = vdwg.mxu0
        %v905 = vsel %vm855, %v852, 0
        %v908 = vsel %vm859, %v848, 0
        %910 = vmatprep.subr.bf16.mxu0 0
        %911 = vmatpush1.bf16.msra.mxu0 %v908
        %912 = vmatprep.subr.bf16.mxu0 0
        %913 = vmatpush1.bf16.msra.mxu0 0
        %914 = vmatprep.subr.bf16.mxu0 0
        %915 = vmatpush1.bf16.msra.mxu0 0
        %916 = vmatprep.subr.bf16.mxu0 0
        %917 = vmatpush1.bf16.msra.mxu0 0
        %918 = vmatprep.subr.bf16.mxu0 0
        %919 = vmatpush1.bf16.msra.mxu0 0
        %920 = vmatprep.subr.bf16.mxu0 0
        %921 = vmatpush1.bf16.msra.mxu0 0
        %922 = vmatprep.subr.bf16.mxu0 0
        %923 = vmatpush1.bf16.msra.mxu0 0
        %924 = vmatprep.subr.bf16.mxu0 0
        %925 = vmatpush1.bf16.msra.mxu0 0
        %926 = vmatprep.subr.bf16.mxu0 0
        %927 = vmatpush1.bf16.msra.mxu0 0
        %928 = vmatprep.subr.bf16.mxu0 0
        %929 = vmatpush1.bf16.msra.mxu0 0
        %930 = vmatprep.subr.bf16.mxu0 0
        %931 = vmatpush1.bf16.msra.mxu0 0
        %932 = vmatprep.subr.bf16.mxu0 0
        %933 = vmatpush1.bf16.msra.mxu0 0
        %934 = vmatprep.subr.bf16.mxu0 0
        %935 = vmatpush1.bf16.msra.mxu0 0
        %936 = vmatprep.subr.bf16.mxu0 0
        %937 = vmatpush1.bf16.msra.mxu0 0
        %938 = vmatprep.subr.bf16.mxu0 0
        %939 = vmatpush1.bf16.msra.mxu0 0
        %940 = vmatprep.subr.bf16.mxu0 0
        %941 = vmatpush1.bf16.msra.mxu0 0
        %942 = vmatprep.mubr.bf16.mxu0 0
        %943 = vmatmul.mubr.bf16.gmra.mrb[0].mxu0 %v905
        %v944 = vpop.f32.mrb[0].mxu0
        %v945 = vadd.f32 0.0, %v944
        %v946 = vpop.f32.mrb[0].mxu0
        %v947 = vpop.f32.mrb[0].mxu0
        %v948 = vadd.f32 0.0, %v947
        %v949 = vpop.f32.mrb[0].mxu0
        %950 = vdwg.mxu0
        %v952 = vsel %vm855, %v853, 0
        %v955 = vsel %vm859, %v849, 0
        %957 = vmatprep.subr.bf16.mxu0 0
        %958 = vmatpush1.bf16.msra.mxu0 %v955
        %959 = vmatprep.subr.bf16.mxu0 0
        %960 = vmatpush1.bf16.msra.mxu0 0
        %961 = vmatprep.subr.bf16.mxu0 0
        %962 = vmatpush1.bf16.msra.mxu0 0
        %963 = vmatprep.subr.bf16.mxu0 0
        %964 = vmatpush1.bf16.msra.mxu0 0
        %965 = vmatprep.subr.bf16.mxu0 0
        %966 = vmatpush1.bf16.msra.mxu0 0
        %967 = vmatprep.subr.bf16.mxu0 0
        %968 = vmatpush1.bf16.msra.mxu0 0
        %969 = vmatprep.subr.bf16.mxu0 0
        %970 = vmatpush1.bf16.msra.mxu0 0
        %971 = vmatprep.subr.bf16.mxu0 0
        %972 = vmatpush1.bf16.msra.mxu0 0
        %973 = vmatprep.subr.bf16.mxu0 0
        %974 = vmatpush1.bf16.msra.mxu0 0
        %975 = vmatprep.subr.bf16.mxu0 0
        %976 = vmatpush1.bf16.msra.mxu0 0
        %977 = vmatprep.subr.bf16.mxu0 0
        %978 = vmatpush1.bf16.msra.mxu0 0
        %979 = vmatprep.subr.bf16.mxu0 0
        %980 = vmatpush1.bf16.msra.mxu0 0
        %981 = vmatprep.subr.bf16.mxu0 0
        %982 = vmatpush1.bf16.msra.mxu0 0
        %983 = vmatprep.subr.bf16.mxu0 0
        %984 = vmatpush1.bf16.msra.mxu0 0
        %985 = vmatprep.subr.bf16.mxu0 0
        %986 = vmatpush1.bf16.msra.mxu0 0
        %987 = vmatprep.subr.bf16.mxu0 0
        %988 = vmatpush1.bf16.msra.mxu0 0
        %989 = vmatprep.mubr.bf16.mxu0 0
        %990 = vmatmul.mubr.bf16.gmra.mrb[0].mxu0 %v952
        %v991 = vpop.f32.mrb[0].mxu0
        %v992 = vadd.f32 0.0, %v991
        %v993 = vpop.f32.mrb[0].mxu0
        %v994 = vpop.f32.mrb[0].mxu0
        %v995 = vadd.f32 0.0, %v994
        %v996 = vpop.f32.mrb[0].mxu0
        %997 = vdwg.mxu0
        %v999 = vsel %vm855, %v854, 0
        %v1002 = vsel %vm859, %v850, 0
        %1004 = vmatprep.subr.bf16.mxu0 0
        %1005 = vmatpush1.bf16.msra.mxu0 %v1002
        %1006 = vmatprep.subr.bf16.mxu0 0
        %1007 = vmatpush1.bf16.msra.mxu0 0
        %1008 = vmatprep.subr.bf16.mxu0 0
        %1009 = vmatpush1.bf16.msra.mxu0 0
        %1010 = vmatprep.subr.bf16.mxu0 0
        %1011 = vmatpush1.bf16.msra.mxu0 0
        %1012 = vmatprep.subr.bf16.mxu0 0
        %1013 = vmatpush1.bf16.msra.mxu0 0
        %1014 = vmatprep.subr.bf16.mxu0 0
        %1015 = vmatpush1.bf16.msra.mxu0 0
        %1016 = vmatprep.subr.bf16.mxu0 0
        %1017 = vmatpush1.bf16.msra.mxu0 0
        %1018 = vmatprep.subr.bf16.mxu0 0
        %1019 = vmatpush1.bf16.msra.mxu0 0
        %1020 = vmatprep.subr.bf16.mxu0 0
        %1021 = vmatpush1.bf16.msra.mxu0 0
        %1022 = vmatprep.subr.bf16.mxu0 0
        %1023 = vmatpush1.bf16.msra.mxu0 0
        %1024 = vmatprep.subr.bf16.mxu0 0
        %1025 = vmatpush1.bf16.msra.mxu0 0
        %1026 = vmatprep.subr.bf16.mxu0 0
        %1027 = vmatpush1.bf16.msra.mxu0 0
        %1028 = vmatprep.subr.bf16.mxu0 0
        %1029 = vmatpush1.bf16.msra.mxu0 0
        %1030 = vmatprep.subr.bf16.mxu0 0
        %1031 = vmatpush1.bf16.msra.mxu0 0
        %1032 = vmatprep.subr.bf16.mxu0 0
        %1033 = vmatpush1.bf16.msra.mxu0 0
        %1034 = vmatprep.subr.bf16.mxu0 0
        %1035 = vmatpush1.bf16.msra.mxu0 0
        %1036 = vmatprep.mubr.bf16.mxu0 0
        %1037 = vmatmul.mubr.bf16.gmra.mrb[0].mxu0 %v999
        %v1038 = vpop.f32.mrb[0].mxu0
        %v1039 = vadd.f32 0.0, %v1038
        %v1040 = vpop.f32.mrb[0].mxu0
        %v1041 = vpop.f32.mrb[0].mxu0
        %v1042 = vadd.f32 0.0, %v1041
        %v1043 = vpop.f32.mrb[0].mxu0
        %1044 = vdwg.mxu0
        %v1045 = vsel %vm855, %v898, -inf
        %v1046 = vsel %vm855, %v901, -inf
        %v1047 = vmax.f32 %v1045, %v1046
        %v1048 = vrot.slane %v1047, 4
        %v1049 = vmax.f32 %v1047, %v1048
        %v1050 = vrot.slane %v1049, 2
        %v1051 = vmax.f32 %v1049, %v1050
        %v1052 = vrot.slane %v1051, 1
        %v1053 = vmax.f32 %v1051, %v1052
        %v1054 = vsel %vm855, %v945, -inf
        %v1055 = vsel %vm855, %v948, -inf
        %v1056 = vmax.f32 %v1054, %v1055
        %v1057 = vrot.slane %v1056, 4
        %v1058 = vmax.f32 %v1056, %v1057
        %v1059 = vrot.slane %v1058, 2
        %v1060 = vmax.f32 %v1058, %v1059
        %v1061 = vrot.slane %v1060, 1
        %v1062 = vmax.f32 %v1060, %v1061
        %v1063 = vsel %vm855, %v992, -inf
        %v1064 = vsel %vm855, %v995, -inf
        %v1065 = vmax.f32 %v1063, %v1064
        %v1066 = vrot.slane %v1065, 4
        %v1067 = vmax.f32 %v1065, %v1066
        %v1068 = vrot.slane %v1067, 2
        %v1069 = vmax.f32 %v1067, %v1068
        %v1070 = vrot.slane %v1069, 1
        %v1071 = vmax.f32 %v1069, %v1070
        %v1072 = vsel %vm855, %v1039, -inf
        %v1073 = vsel %vm855, %v1042, -inf
        %v1074 = vmax.f32 %v1072, %v1073
        %v1075 = vrot.slane %v1074, 4
        %v1076 = vmax.f32 %v1074, %v1075
        %v1077 = vrot.slane %v1076, 2
        %v1078 = vmax.f32 %v1076, %v1077
        %v1079 = vrot.slane %v1078, 1
        %v1080 = vmax.f32 %v1078, %v1079
        %v1081 = vsub.f32 %v898, %v1053
        %v1082 = vsub.f32 %v901, %v1053
        %v1083 = vsub.f32 %v945, %v1062
        %v1084 = vsub.f32 %v948, %v1062
        %v1085 = vsub.f32 %v992, %v1071
        %v1086 = vsub.f32 %v995, %v1071
        %v1087 = vsub.f32 %v1039, %v1080
        %v1088 = vsub.f32 %v1042, %v1080
        %v1089 = vmul.f32 %v1081, 1.442695
        %v1090 = vpow.pop %v1089
        %v1091 = vmul.f32 %v1082, 1.442695
        %v1092 = vpow.pop %v1091
        %v1093 = vmul.f32 %v1083, 1.442695
        %v1094 = vpow.pop %v1093
        %v1095 = vmul.f32 %v1084, 1.442695
        %v1096 = vpow.pop %v1095
        %v1097 = vmul.f32 %v1085, 1.442695
        %v1098 = vpow.pop %v1097
        %v1099 = vmul.f32 %v1086, 1.442695
        %v1100 = vpow.pop %v1099
        %v1101 = vmul.f32 %v1087, 1.442695
        %v1102 = vpow.pop %v1101
        %v1103 = vmul.f32 %v1088, 1.442695
        %v1104 = vpow.pop %v1103
        %v1105 = vsel %vm855, %v1090, 0.0
        %v1106 = vsel %vm855, %v1092, 0.0
        %v1107 = vadd.f32 %v1105, %v1106
        %v1108 = vrot.slane %v1107, 4
        %v1109 = vadd.f32 %v1107, %v1108
        %v1110 = vrot.slane %v1109, 2
        %v1111 = vadd.f32 %v1109, %v1110
        %v1112 = vrot.slane %v1111, 1
        %v1113 = vadd.f32 %v1111, %v1112
        %v1114 = vsel %vm855, %v1094, 0.0
        %v1115 = vsel %vm855, %v1096, 0.0
        %v1116 = vadd.f32 %v1114, %v1115
        %v1117 = vrot.slane %v1116, 4
        %v1118 = vadd.f32 %v1116, %v1117
        %v1119 = vrot.slane %v1118, 2
        %v1120 = vadd.f32 %v1118, %v1119
        %v1121 = vrot.slane %v1120, 1
        %v1122 = vadd.f32 %v1120, %v1121
        %v1123 = vsel %vm855, %v1098, 0.0
        %v1124 = vsel %vm855, %v1100, 0.0
        %v1125 = vadd.f32 %v1123, %v1124
        %v1126 = vrot.slane %v1125, 4
        %v1127 = vadd.f32 %v1125, %v1126
        %v1128 = vrot.slane %v1127, 2
        %v1129 = vadd.f32 %v1127, %v1128
        %v1130 = vrot.slane %v1129, 1
        %v1131 = vadd.f32 %v1129, %v1130
        %v1132 = vsel %vm855, %v1102, 0.0
        %v1133 = vsel %vm855, %v1104, 0.0
        %v1134 = vadd.f32 %v1132, %v1133
        %v1135 = vrot.slane %v1134, 4
        %v1136 = vadd.f32 %v1134, %v1135
        %v1137 = vrot.slane %v1136, 2
        %v1138 = vadd.f32 %v1136, %v1137
        %v1139 = vrot.slane %v1138, 1
        %v1140 = vadd.f32 %v1138, %v1139
        %v1141 = vrcp.pop %v1113
        %v1142 = vrcp.pop %v1122
        %v1143 = vrcp.pop %v1131
        %v1144 = vrcp.pop %v1140
        %v1145 = vmul.f32 %v1090, %v1141
        %v1146 = vmul.f32 %v1092, %v1141
        %v1147 = vmul.f32 %v1094, %v1142
        %v1148 = vmul.f32 %v1096, %v1142
        %v1149 = vmul.f32 %v1098, %v1143
        %v1150 = vmul.f32 %v1100, %v1143
        %v1151 = vmul.f32 %v1102, %v1144
        %v1152 = vmul.f32 %v1104, %v1144
        %v1153 = vld [vmem:[#allocation3] sm:$0xf]
        %v1154 = vld [vmem:[#allocation3 + $0x4] sm:$0xf]
        %v1155 = vld [vmem:[#allocation3 + $0x8] sm:$0xf]
        %v1156 = vld [vmem:[#allocation3 + $0xc] sm:$0xf]
        %v1157 = vpack.c.bf16 %v1146, %v1145
        %v1158 = vpack.c.bf16 %v1148, %v1147
        %v1159 = vpack.c.bf16 %v1150, %v1149
        %v1160 = vpack.c.bf16 %v1152, %v1151
        %vm1161 = vcmask 130048
        %v1163 = vsel %vm1161, %v1153, 0
        %1165 = vmatprep.subr.bf16.mxu0 0
        %1166 = vmatpush1.bf16.msra.mxu0 %v1157
        %1167 = vmatprep.subr.bf16.mxu0 0
        %1168 = vmatpush1.bf16.msra.mxu0 0
        %1169 = vmatprep.subr.bf16.mxu0 0
        %1170 = vmatpush1.bf16.msra.mxu0 0
        %1171 = vmatprep.subr.bf16.mxu0 0
        %1172 = vmatpush1.bf16.msra.mxu0 0
        %1173 = vmatprep.subr.bf16.mxu0 0
        %1174 = vmatpush1.bf16.msra.mxu0 0
        %1175 = vmatprep.subr.bf16.mxu0 0
        %1176 = vmatpush1.bf16.msra.mxu0 0
        %1177 = vmatprep.subr.bf16.mxu0 0
        %1178 = vmatpush1.bf16.msra.mxu0 0
        %1179 = vmatprep.subr.bf16.mxu0 0
        %1180 = vmatpush1.bf16.msra.mxu0 0
        %1181 = vmatprep.subr.bf16.mxu0 0
        %1182 = vmatpush1.bf16.msra.mxu0 0
        %1183 = vmatprep.subr.bf16.mxu0 0
        %1184 = vmatpush1.bf16.msra.mxu0 0
        %1185 = vmatprep.subr.bf16.mxu0 0
        %1186 = vmatpush1.bf16.msra.mxu0 0
        %1187 = vmatprep.subr.bf16.mxu0 0
        %1188 = vmatpush1.bf16.msra.mxu0 0
        %1189 = vmatprep.subr.bf16.mxu0 0
        %1190 = vmatpush1.bf16.msra.mxu0 0
        %1191 = vmatprep.subr.bf16.mxu0 0
        %1192 = vmatpush1.bf16.msra.mxu0 0
        %1193 = vmatprep.subr.bf16.mxu0 0
        %1194 = vmatpush1.bf16.msra.mxu0 0
        %1195 = vmatprep.subr.bf16.mxu0 0
        %1196 = vmatpush1.bf16.msra.mxu0 0
        %1197 = vmatprep.mubr.bf16.mxu0 0
        %1198 = vmatmul.mubr.bf16.gmra.mrb[0].mxu0 %v1163
        %v1199 = vpop.f32.mrb[0].mxu0
        %v1200 = vadd.f32 0.0, %v1199
        %v1201 = vpop.f32.mrb[0].mxu0
        %v1202 = vpop.f32.mrb[0].mxu0
        %v1203 = vpop.f32.mrb[0].mxu0
        %1204 = vdwg.mxu0
        %v1206 = vsel %vm1161, %v1154, 0
        %1208 = vmatprep.subr.bf16.mxu0 0
        %1209 = vmatpush1.bf16.msra.mxu0 %v1158
        %1210 = vmatprep.subr.bf16.mxu0 0
        %1211 = vmatpush1.bf16.msra.mxu0 0
        %1212 = vmatprep.subr.bf16.mxu0 0
        %1213 = vmatpush1.bf16.msra.mxu0 0
        %1214 = vmatprep.subr.bf16.mxu0 0
        %1215 = vmatpush1.bf16.msra.mxu0 0
        %1216 = vmatprep.subr.bf16.mxu0 0
        %1217 = vmatpush1.bf16.msra.mxu0 0
        %1218 = vmatprep.subr.bf16.mxu0 0
        %1219 = vmatpush1.bf16.msra.mxu0 0
        %1220 = vmatprep.subr.bf16.mxu0 0
        %1221 = vmatpush1.bf16.msra.mxu0 0
        %1222 = vmatprep.subr.bf16.mxu0 0
        %1223 = vmatpush1.bf16.msra.mxu0 0
        %1224 = vmatprep.subr.bf16.mxu0 0
        %1225 = vmatpush1.bf16.msra.mxu0 0
        %1226 = vmatprep.subr.bf16.mxu0 0
        %1227 = vmatpush1.bf16.msra.mxu0 0
        %1228 = vmatprep.subr.bf16.mxu0 0
        %1229 = vmatpush1.bf16.msra.mxu0 0
        %1230 = vmatprep.subr.bf16.mxu0 0
        %1231 = vmatpush1.bf16.msra.mxu0 0
        %1232 = vmatprep.subr.bf16.mxu0 0
        %1233 = vmatpush1.bf16.msra.mxu0 0
        %1234 = vmatprep.subr.bf16.mxu0 0
        %1235 = vmatpush1.bf16.msra.mxu0 0
        %1236 = vmatprep.subr.bf16.mxu0 0
        %1237 = vmatpush1.bf16.msra.mxu0 0
        %1238 = vmatprep.subr.bf16.mxu0 0
        %1239 = vmatpush1.bf16.msra.mxu0 0
        %1240 = vmatprep.mubr.bf16.mxu0 0
        %1241 = vmatmul.mubr.bf16.gmra.mrb[0].mxu0 %v1206
        %v1242 = vpop.f32.mrb[0].mxu0
        %v1243 = vadd.f32 0.0, %v1242
        %v1244 = vpop.f32.mrb[0].mxu0
        %v1245 = vpop.f32.mrb[0].mxu0
        %v1246 = vpop.f32.mrb[0].mxu0
        %1247 = vdwg.mxu0
        %v1249 = vsel %vm1161, %v1155, 0
        %1251 = vmatprep.subr.bf16.mxu0 0
        %1252 = vmatpush1.bf16.msra.mxu0 %v1159
        %1253 = vmatprep.subr.bf16.mxu0 0
        %1254 = vmatpush1.bf16.msra.mxu0 0
        %1255 = vmatprep.subr.bf16.mxu0 0
        %1256 = vmatpush1.bf16.msra.mxu0 0
        %1257 = vmatprep.subr.bf16.mxu0 0
        %1258 = vmatpush1.bf16.msra.mxu0 0
        %1259 = vmatprep.subr.bf16.mxu0 0
        %1260 = vmatpush1.bf16.msra.mxu0 0
        %1261 = vmatprep.subr.bf16.mxu0 0
        %1262 = vmatpush1.bf16.msra.mxu0 0
        %1263 = vmatprep.subr.bf16.mxu0 0
        %1264 = vmatpush1.bf16.msra.mxu0 0
        %1265 = vmatprep.subr.bf16.mxu0 0
        %1266 = vmatpush1.bf16.msra.mxu0 0
        %1267 = vmatprep.subr.bf16.mxu0 0
        %1268 = vmatpush1.bf16.msra.mxu0 0
        %1269 = vmatprep.subr.bf16.mxu0 0
        %1270 = vmatpush1.bf16.msra.mxu0 0
        %1271 = vmatprep.subr.bf16.mxu0 0
        %1272 = vmatpush1.bf16.msra.mxu0 0
        %1273 = vmatprep.subr.bf16.mxu0 0
        %1274 = vmatpush1.bf16.msra.mxu0 0
        %1275 = vmatprep.subr.bf16.mxu0 0
        %1276 = vmatpush1.bf16.msra.mxu0 0
        %1277 = vmatprep.subr.bf16.mxu0 0
        %1278 = vmatpush1.bf16.msra.mxu0 0
        %1279 = vmatprep.subr.bf16.mxu0 0
        %1280 = vmatpush1.bf16.msra.mxu0 0
        %1281 = vmatprep.subr.bf16.mxu0 0
        %1282 = vmatpush1.bf16.msra.mxu0 0
        %1283 = vmatprep.mubr.bf16.mxu0 0
        %1284 = vmatmul.mubr.bf16.gmra.mrb[0].mxu0 %v1249
        %v1285 = vpop.f32.mrb[0].mxu0
        %v1286 = vadd.f32 0.0, %v1285
        %v1287 = vpop.f32.mrb[0].mxu0
        %v1288 = vpop.f32.mrb[0].mxu0
        %v1289 = vpop.f32.mrb[0].mxu0
        %1290 = vdwg.mxu0
        %v1292 = vsel %vm1161, %v1156, 0
        %1294 = vmatprep.subr.bf16.mxu0 0
        %1295 = vmatpush1.bf16.msra.mxu0 %v1160
        %1296 = vmatprep.subr.bf16.mxu0 0
        %1297 = vmatpush1.bf16.msra.mxu0 0
        %1298 = vmatprep.subr.bf16.mxu0 0
        %1299 = vmatpush1.bf16.msra.mxu0 0
        %1300 = vmatprep.subr.bf16.mxu0 0
        %1301 = vmatpush1.bf16.msra.mxu0 0
        %1302 = vmatprep.subr.bf16.mxu0 0
        %1303 = vmatpush1.bf16.msra.mxu0 0
        %1304 = vmatprep.subr.bf16.mxu0 0
        %1305 = vmatpush1.bf16.msra.mxu0 0
        %1306 = vmatprep.subr.bf16.mxu0 0
        %1307 = vmatpush1.bf16.msra.mxu0 0
        %1308 = vmatprep.subr.bf16.mxu0 0
        %1309 = vmatpush1.bf16.msra.mxu0 0
        %1310 = vmatprep.subr.bf16.mxu0 0
        %1311 = vmatpush1.bf16.msra.mxu0 0
        %1312 = vmatprep.subr.bf16.mxu0 0
        %1313 = vmatpush1.bf16.msra.mxu0 0
        %1314 = vmatprep.subr.bf16.mxu0 0
        %1315 = vmatpush1.bf16.msra.mxu0 0
        %1316 = vmatprep.subr.bf16.mxu0 0
        %1317 = vmatpush1.bf16.msra.mxu0 0
        %1318 = vmatprep.subr.bf16.mxu0 0
        %1319 = vmatpush1.bf16.msra.mxu0 0
        %1320 = vmatprep.subr.bf16.mxu0 0
        %1321 = vmatpush1.bf16.msra.mxu0 0
        %1322 = vmatprep.subr.bf16.mxu0 0
        %1323 = vmatpush1.bf16.msra.mxu0 0
        %1324 = vmatprep.subr.bf16.mxu0 0
        %1325 = vmatpush1.bf16.msra.mxu0 0
        %1326 = vmatprep.mubr.bf16.mxu0 0
        %1327 = vmatmul.mubr.bf16.gmra.mrb[0].mxu0 %v1292
        %v1328 = vpop.f32.mrb[0].mxu0
        %v1329 = vadd.f32 0.0, %v1328
        %v1330 = vpop.f32.mrb[0].mxu0
        %v1331 = vpop.f32.mrb[0].mxu0
        %v1332 = vpop.f32.mrb[0].mxu0
        %1333 = vdwg.mxu0
        %1334 = vxpose.xlu0.b32.start [1/16] %v1200, 128
        %1335 = vxpose.xlu0.b32.cont [2/16] %v1243, 128
        %1336 = vxpose.xlu0.b32.cont [3/16] %v1286, 128
        %1337 = vxpose.xlu0.b32.cont [4/16] %v1329, 128
        %1338 = vxpose.xlu0.b32.cont [5/16] 0.0, 128
        %1339 = vxpose.xlu0.b32.cont [6/16] 0.0, 128
        %1340 = vxpose.xlu0.b32.cont [7/16] 0.0, 128
        %1341 = vxpose.xlu0.b32.cont [8/16] 0.0, 128
        %1342 = vxpose.xlu0.b32.cont [9/16] 0.0, 128
        %1343 = vxpose.xlu0.b32.cont [10/16] 0.0, 128
        %1344 = vxpose.xlu0.b32.cont [11/16] 0.0, 128
        %1345 = vxpose.xlu0.b32.cont [12/16] 0.0, 128
        %1346 = vxpose.xlu0.b32.cont [13/16] 0.0, 128
        %1347 = vxpose.xlu0.b32.cont [14/16] 0.0, 128
        %1348 = vxpose.xlu0.b32.cont [15/16] 0.0, 128
        %1349 = vxpose.xlu0.b32.end [16/16] 0.0, 128
        %v1350 = vpop.trf.xlu0
        %v1351 = vpop.trf.xlu0
        %v1352 = vpop.trf.xlu0
        %v1353 = vpop.trf.xlu0
        %v1354 = vpop.trf.xlu0
        %v1355 = vpop.trf.xlu0
        %v1356 = vpop.trf.xlu0
        %v1357 = vpop.trf.xlu0
        %v1358 = vpop.trf.xlu0
        %v1359 = vpop.trf.xlu0
        %v1360 = vpop.trf.xlu0
        %v1361 = vpop.trf.xlu0
        %v1362 = vpop.trf.xlu0
        %v1363 = vpop.trf.xlu0
        %v1364 = vpop.trf.xlu0
        %v1365 = vpop.trf.xlu0
        %v1366 = vpack.c.bf16 %v1350, %v1350
        %v1367 = vld [vmem:[%s7] sm:$0xf]
        %v1368 = vld [vmem:[%s7 + $0x4] sm:$0xf]
        %v1369 = vld [vmem:[%s7 + $0x8] sm:$0xf]
        %v1370 = vld [vmem:[%s7 + $0xc] sm:$0xf]
        %v1371 = vld [vmem:[#allocation9] sm:$0x1]
        %v1373 = vlaneseq
        %v1374 = vshrl.u32 %v1373, 7
        %v1375 = vsub.s32 0, %v1374
        %v1376 = vrot.slane %v1371, %v1375
        %v1382 = vunpack.c.l.b16 %v1367
        %v1383 = vunpack.c.l.b16 %v1368
        %v1384 = vunpack.c.l.b16 %v1369
        %v1385 = vunpack.c.l.b16 %v1370
        %v1386 = vpack.c.b16 %v1383, %v1382
        %v1387 = vpack.c.b16 %v1385, %v1384
        %v1391 = vsel %vm719, %v1366, 0
        %1393 = vmatprep.subr.bf16.mxu0 0
        %1394 = vmatpush1.bf16.msra.mxu0 %v1386
        %1395 = vmatprep.subr.bf16.mxu0 0
        %1396 = vmatpush1.bf16.msra.mxu0 %v1387
        %1397 = vmatprep.subr.bf16.mxu0 0
        %1398 = vmatpush1.bf16.msra.mxu0 0
        %1399 = vmatprep.subr.bf16.mxu0 0
        %1400 = vmatpush1.bf16.msra.mxu0 0
        %1401 = vmatprep.subr.bf16.mxu0 0
        %1402 = vmatpush1.bf16.msra.mxu0 0
        %1403 = vmatprep.subr.bf16.mxu0 0
        %1404 = vmatpush1.bf16.msra.mxu0 0
        %1405 = vmatprep.subr.bf16.mxu0 0
        %1406 = vmatpush1.bf16.msra.mxu0 0
        %1407 = vmatprep.subr.bf16.mxu0 0
        %1408 = vmatpush1.bf16.msra.mxu0 0
        %1409 = vmatprep.subr.bf16.mxu0 0
        %1410 = vmatpush1.bf16.msra.mxu0 0
        %1411 = vmatprep.subr.bf16.mxu0 0
        %1412 = vmatpush1.bf16.msra.mxu0 0
        %1413 = vmatprep.subr.bf16.mxu0 0
        %1414 = vmatpush1.bf16.msra.mxu0 0
        %1415 = vmatprep.subr.bf16.mxu0 0
        %1416 = vmatpush1.bf16.msra.mxu0 0
        %1417 = vmatprep.subr.bf16.mxu0 0
        %1418 = vmatpush1.bf16.msra.mxu0 0
        %1419 = vmatprep.subr.bf16.mxu0 0
        %1420 = vmatpush1.bf16.msra.mxu0 0
        %1421 = vmatprep.subr.bf16.mxu0 0
        %1422 = vmatpush1.bf16.msra.mxu0 0
        %1423 = vmatprep.subr.bf16.mxu0 0
        %1424 = vmatpush1.bf16.msra.mxu0 0
        %1425 = vmatprep.mubr.bf16.mxu0 0
        %1426 = vmatmul.mubr.bf16.gmra.mrb[0].mxu0 %v1391
        %v1427 = vpop.f32.mrb[0].mxu0
        %v1428 = vadd.f32 %v1376, %v1427
        %v1429 = vpop.f32.mrb[0].mxu0
        %v1430 = vpop.f32.mrb[0].mxu0
        %v1431 = vpop.f32.mrb[0].mxu0
        %1432 = vdwg.mxu0
        %v1433 = vadd.f32 %v1428, %v747
        %v1434 = vld [vmem:[#allocation10] sm:$0x1]
        %v1435 = vld [vmem:[%s10] sm:$0x1]
        %v1436 = vsel %vm719, %v1433, 0.0
        %1437 = vadd.xlane.f32.xlu0 %v1436
        %v1438 = vpop.xlane.xlu0 %1437
        %v1439 = vmul.f32 %v1438, %v723
        %v1440 = vsub.f32 %v1433, %v1439
        %v1441 = vmul.f32 %v1440, %v1440
        %v1442 = vsel %vm719, %v1441, 0.0
        %1443 = vadd.xlane.f32.xlu0 %v1442
        %v1444 = vpop.xlane.xlu0 %1443
        %v1445 = vmul.f32 %v1444, %v723
        %v1446 = vadd.f32 %v1445, 1e-05
        %v1447 = vrsqrt.pop %v1446
        %v1448 = vmul.f32 %v1440, %v1447
        %v1450 = vlaneseq
        %v1451 = vshrl.u32 %v1450, 7
        %v1452 = vsub.s32 0, %v1451
        %v1453 = vrot.slane %v1434, %v1452
        %v1455 = vmul.f32 %v1448, %v1453
        %v1457 = vlaneseq
        %v1458 = vshrl.u32 %v1457, 7
        %v1459 = vsub.s32 0, %v1458
        %v1460 = vrot.slane %v1435, %v1459
        %v1462 = vadd.f32 %v1455, %v1460
        %v1463 = vpack.c.bf16 %v1462, %v1462
        %v1464 = vld [vmem:[%s11] sm:$0xf]
        %v1465 = vld [vmem:[%s11 + $0x4] sm:$0xf]
        %v1466 = vld [vmem:[%s11 + $0x8] sm:$0xf]
        %v1467 = vld [vmem:[%s11 + $0xc] sm:$0xf]
        %v1468 = vld [vmem:[%s12] sm:$0x1]
        %v1470 = vlaneseq
        %v1471 = vshrl.u32 %v1470, 7
        %v1472 = vsub.s32 0, %v1471
        %v1473 = vrot.slane %v1468, %v1472
        %v1479 = vunpack.c.l.b16 %v1464
        %v1480 = vunpack.c.l.b16 %v1465
        %v1481 = vunpack.c.l.b16 %v1466
        %v1482 = vunpack.c.l.b16 %v1467
        %v1483 = vpack.c.b16 %v1480, %v1479
        %v1484 = vpack.c.b16 %v1482, %v1481
        %v1488 = vsel %vm719, %v1463, 0
        %1490 = vmatprep.subr.bf16.mxu0 0
        %1491 = vmatpush1.bf16.msra.mxu0 %v1483
        %1492 = vmatprep.subr.bf16.mxu0 0
        %1493 = vmatpush1.bf16.msra.mxu0 %v1484
        %1494 = vmatprep.subr.bf16.mxu0 0
        %1495 = vmatpush1.bf16.msra.mxu0 0
        %1496 = vmatprep.subr.bf16.mxu0 0
        %1497 = vmatpush1.bf16.msra.mxu0 0
        %1498 = vmatprep.subr.bf16.mxu0 0
        %1499 = vmatpush1.bf16.msra.mxu0 0
        %1500 = vmatprep.subr.bf16.mxu0 0
        %1501 = vmatpush1.bf16.msra.mxu0 0
        %1502 = vmatprep.subr.bf16.mxu0 0
        %1503 = vmatpush1.bf16.msra.mxu0 0
        %1504 = vmatprep.subr.bf16.mxu0 0
        %1505 = vmatpush1.bf16.msra.mxu0 0
        %1506 = vmatprep.subr.bf16.mxu0 0
        %1507 = vmatpush1.bf16.msra.mxu0 0
        %1508 = vmatprep.subr.bf16.mxu0 0
        %1509 = vmatpush1.bf16.msra.mxu0 0
        %1510 = vmatprep.subr.bf16.mxu0 0
        %1511 = vmatpush1.bf16.msra.mxu0 0
        %1512 = vmatprep.subr.bf16.mxu0 0
        %1513 = vmatpush1.bf16.msra.mxu0 0
        %1514 = vmatprep.subr.bf16.mxu0 0
        %1515 = vmatpush1.bf16.msra.mxu0 0
        %1516 = vmatprep.subr.bf16.mxu0 0
        %1517 = vmatpush1.bf16.msra.mxu0 0
        %1518 = vmatprep.subr.bf16.mxu0 0
        %1519 = vmatpush1.bf16.msra.mxu0 0
        %1520 = vmatprep.subr.bf16.mxu0 0
        %1521 = vmatpush1.bf16.msra.mxu0 0
        %1522 = vmatprep.mubr.bf16.mxu0 0
        %1523 = vmatmul.mubr.bf16.gmra.mrb[0].mxu0 %v1488
        %v1524 = vpop.f32.mrb[0].mxu0
        %v1525 = vadd.f32 %v1473, %v1524
        %v1526 = vpop.f32.mrb[0].mxu0
        %v1527 = vpop.f32.mrb[0].mxu0
        %v1528 = vpop.f32.mrb[0].mxu0
        %1529 = vdwg.mxu0
        %v1530 = vpack.c.bf16 %v1525, %v1525
        %v1531 = vmul.bf16 %v1530, 1056980736
        %v1532 = vmul.bf16 %v1530, 1027030327
        %v1533 = vmul.bf16 %v1532, %v1530
        %v1534 = vmul.bf16 %v1533, %v1530
        %v1535 = vadd.bf16 %v1530, %v1534
        %v1536 = vmul.bf16 %v1535, 1061961548
        %v1537 = vtanh.bf16.pop %v1536
        %v1538 = vadd.bf16 %v1537, 1065369472
        %v1539 = vmul.bf16 %v1531, %v1538
        %v1540 = vld [vmem:[%s13] sm:$0xf]
        %v1541 = vld [vmem:[%s13 + $0x4] sm:$0xf]
        %v1542 = vld [vmem:[%s13 + $0x8] sm:$0xf]
        %v1543 = vld [vmem:[%s13 + $0xc] sm:$0xf]
        %v1544 = vld [vmem:[%s13 + $0x10] sm:$0xf]
        %v1545 = vld [vmem:[%s13 + $0x14] sm:$0xf]
        %v1546 = vld [vmem:[%s13 + $0x18] sm:$0xf]
        %v1547 = vld [vmem:[%s13 + $0x1c] sm:$0xf]
        %v1548 = vld [vmem:[%s13 + $0x20] sm:$0xf]
        %v1549 = vld [vmem:[%s13 + $0x24] sm:$0xf]
        %v1550 = vld [vmem:[%s13 + $0x28] sm:$0xf]
        %v1551 = vld [vmem:[%s13 + $0x2c] sm:$0xf]
        %v1552 = vld [vmem:[%s13 + $0x30] sm:$0xf]
        %v1553 = vld [vmem:[%s13 + $0x34] sm:$0xf]
        %v1554 = vld [vmem:[%s13 + $0x38] sm:$0xf]
        %v1555 = vld [vmem:[%s13 + $0x3c] sm:$0xf]
        %v1556 = vld [vmem:[%s14] sm:$0x1]
        %v1558 = vlaneseq
        %v1559 = vshrl.u32 %v1558, 7
        %v1560 = vsub.s32 0, %v1559
        %v1561 = vrot.slane %v1556, %v1560
        %v1579 = vunpack.c.l.b16 %v1540
        %v1580 = vunpack.c.l.b16 %v1541
        %v1581 = vunpack.c.l.b16 %v1542
        %v1582 = vunpack.c.l.b16 %v1543
        %v1583 = vunpack.c.l.b16 %v1544
        %v1584 = vunpack.c.l.b16 %v1545
        %v1585 = vunpack.c.l.b16 %v1546
        %v1586 = vunpack.c.l.b16 %v1547
        %v1587 = vunpack.c.l.b16 %v1548
        %v1588 = vunpack.c.l.b16 %v1549
        %v1589 = vunpack.c.l.b16 %v1550
        %v1590 = vunpack.c.l.b16 %v1551
        %v1591 = vunpack.c.l.b16 %v1552
        %v1592 = vunpack.c.l.b16 %v1553
        %v1593 = vunpack.c.l.b16 %v1554
        %v1594 = vunpack.c.l.b16 %v1555
        %v1595 = vpack.c.b16 %v1580, %v1579
        %v1596 = vpack.c.b16 %v1582, %v1581
        %v1597 = vpack.c.b16 %v1584, %v1583
        %v1598 = vpack.c.b16 %v1586, %v1585
        %v1599 = vpack.c.b16 %v1588, %v1587
        %v1600 = vpack.c.b16 %v1590, %v1589
        %v1601 = vpack.c.b16 %v1592, %v1591
        %v1602 = vpack.c.b16 %v1594, %v1593
        %1611 = vmatprep.subr.bf16.mxu0 0
        %1612 = vmatpush1.bf16.msra.mxu0 %v1595
        %1613 = vmatprep.subr.bf16.mxu0 0
        %1614 = vmatpush1.bf16.msra.mxu0 %v1596
        %1615 = vmatprep.subr.bf16.mxu0 0
        %1616 = vmatpush1.bf16.msra.mxu0 %v1597
        %1617 = vmatprep.subr.bf16.mxu0 0
        %1618 = vmatpush1.bf16.msra.mxu0 %v1598
        %1619 = vmatprep.subr.bf16.mxu0 0
        %1620 = vmatpush1.bf16.msra.mxu0 %v1599
        %1621 = vmatprep.subr.bf16.mxu0 0
        %1622 = vmatpush1.bf16.msra.mxu0 %v1600
        %1623 = vmatprep.subr.bf16.mxu0 0
        %1624 = vmatpush1.bf16.msra.mxu0 %v1601
        %1625 = vmatprep.subr.bf16.mxu0 0
        %1626 = vmatpush1.bf16.msra.mxu0 %v1602
        %1627 = vmatprep.subr.bf16.mxu0 0
        %1628 = vmatpush1.bf16.msra.mxu0 0
        %1629 = vmatprep.subr.bf16.mxu0 0
        %1630 = vmatpush1.bf16.msra.mxu0 0
        %1631 = vmatprep.subr.bf16.mxu0 0
        %1632 = vmatpush1.bf16.msra.mxu0 0
        %1633 = vmatprep.subr.bf16.mxu0 0
        %1634 = vmatpush1.bf16.msra.mxu0 0
        %1635 = vmatprep.subr.bf16.mxu0 0
        %1636 = vmatpush1.bf16.msra.mxu0 0
        %1637 = vmatprep.subr.bf16.mxu0 0
        %1638 = vmatpush1.bf16.msra.mxu0 0
        %1639 = vmatprep.subr.bf16.mxu0 0
        %1640 = vmatpush1.bf16.msra.mxu0 0
        %1641 = vmatprep.subr.bf16.mxu0 0
        %1642 = vmatpush1.bf16.msra.mxu0 0
        %1643 = vmatprep.mubr.bf16.mxu0 0
        %1644 = vmatmul.mubr.bf16.gmra.mrb[0].mxu0 %v1539
        %v1645 = vpop.f32.mrb[0].mxu0
        %v1646 = vadd.f32 %v1561, %v1645
        %v1647 = vpop.f32.mrb[0].mxu0
        %v1648 = vpop.f32.mrb[0].mxu0
        %v1649 = vpop.f32.mrb[0].mxu0
        %1650 = vdwg.mxu0
        %v1651 = vadd.f32 %v1646, %v1433
        %1652 = vst.msk [vmem:[%s552] sm:$0xff] %vm719, %v1651
        %s1653 = sand.u32 %s374, 1
        %s1654 = scalar_lea.sflag [#allocation6], %s1653
        %s1655 = sand.u32 %s374, 1
        %s1656 = smul.addr %s1655, 8
        %s1657 = scalar_lea.vmem [#allocation12], %s1656
        // Predicated region
        $region101: #{tpu_custom_call.1} parent=79 // pred_check
          %p1658 = pneg %p384
        $region102: #{tpu_custom_call.1} parent=79 // pred_check_branch
          %1660 = sbr.rel (%p1658) target = $region104
        $region103: #{tpu_custom_call.1} parent=79 // pred_region
          %s1662 = ssub.s32 128, 128
          %1663 = vsyncadd %s1654, %s1662
          %s1664 = smul.addr %s36, 2
          %s1665 = sadd.s32 %s37, %s1664
          %s1666 = smul.addr %s1665, 128
          %s1667 = scalar_lea.hbm %s15, %s1666
          %s1669 = sshll.u32 %s1657, 4
          %s1670 = int_to_ptr.vmem [resolvable:$true] %s1669
          %1672 = dma.vmem_to_hbm [thread:$0]  %s1670, 128, %s1667, %s1654
        $region104: #{tpu_custom_call.1} parent=79 // pred_fallthru
          _
      $region80: #{tpu_custom_call.1} parent=5 // pred_fallthru
        _
      %p1673 = scmp.le.s32.totalorder 2, %s27
      // Predicated region
      $region105: #{tpu_custom_call.1} parent=5 // pred_check
        %p1674 = pneg %p1673
      $region106: #{tpu_custom_call.1} parent=5 // pred_check_branch
        %1676 = sbr.rel (%p1674) target = $region108
      $region107: #{tpu_custom_call.1} parent=5 // pred_region
        %s1677 = ssub.s32 %s27, 2
        // Predicated region
        $region109: #{tpu_custom_call.1} parent=107 // pred_check
          %p1678 = pneg %p390
        $region110: #{tpu_custom_call.1} parent=107 // pred_check_branch
          %1680 = sbr.rel (%p1678) target = $region112
        $region111: #{tpu_custom_call.1} parent=107 // pred_region
          %s1681 = sand.u32 %s375, 1
          %s1682 = scalar_lea.sflag [#allocation6], %s1681
          %s1683 = sand.u32 %s375, 1
          %s1684 = smul.addr %s1683, 8
          %s1685 = scalar_lea.vmem [#allocation12], %s1684
          %1686 = dma.done %s1682, 128
        $region112: #{tpu_custom_call.1} parent=107 // pred_fallthru
          _
      $region108: #{tpu_custom_call.1} parent=5 // pred_fallthru
        _
    $region6: #{tpu_custom_call.1} parent=1 // loop_footer
      %s31 = sadd.s32 1, %s27
    $region7: #{tpu_custom_call.1} parent=1 // loop_footer_branch
      %26 = sbr.rel target = $region3
    $region8: #{tpu_custom_call.1} parent=1 // loop_exit
      _
    %1687 = vsyncpa [#allocation5], 1
    %s1688 = scalar_lea.sflag [#allocation5], 1
    %1689 = vsyncpa %s1688, 1
    %1690 = vsyncpa [#allocation8], 1
    %1691 = vsyncpa [#allocation11], 1
    %1692 = vsyncpa [#allocation6], 1
    %s1693 = scalar_lea.sflag [#allocation6], 1
    %1694 = vsyncpa %s1693, 1

</llo_original>
